<compile_context>
chip_gen: v7x
topology: tpu7x:2x2x1
jax: 0.10.0
libtpu: 0.0.40
codegen_flags: <defaults>
</compile_context>

<pallas_src>
import jax
import jax.numpy as jnp
from jax.experimental import pallas as pl
from jax.experimental.pallas import tpu as pltpu

N_IN = 28 * 28      # 784
N_HID = 512
N_OUT = 10
N_OUT_PAD = 128     # lane-dense padded fc2 width
_SUB = 16           # bf16 sublane packing


def _round_up(n, m):
    return ((n + m - 1) // m) * m


def _mlp_kernel(x_ref, w1_ref, b1_ref, w2_ref, b2_ref, o_ref):
    # x_ref:  (TB, 784)  bf16    w1_ref: (784, 512) bf16    b1_ref: (1, 512) f32
    # w2_ref: (512, 128) bf16    b2_ref: (1, 128)   f32     o_ref:  (TB, 128) f32
    # fc1 + ReLU: bf16 operands, f32 MXU accumulate; bias/ReLU in f32 on the VPU.
    h = jnp.dot(x_ref[...], w1_ref[...], preferred_element_type=jnp.float32)
    h = jnp.maximum(h + b1_ref[...], 0.0)
    # fc2: output padded to 128 lanes -> unmasked, lane-dense stores.
    y = jnp.dot(h.astype(jnp.bfloat16), w2_ref[...],
                preferred_element_type=jnp.float32)
    o_ref[...] = y + b2_ref[...]


def simple_nn_forward(x, w1k, b1k, w2k, b2k, *, batch_tile=256):
    """x: (B, 1, 28, 28) or (B, 784) float32. Params in kernel layout (pack_params).
    Returns (B, 10) float32."""
    x2d = x.reshape(-1, N_IN).astype(jnp.bfloat16)
    B = x2d.shape[0]

    # Batch tile: multiple of 16 (bf16 sublane pack), capped at the (padded) batch.
    bt = min(_round_up(batch_tile, _SUB), _round_up(B, _SUB))
    # Keep >= 2 grid steps when the batch allows it so v7x's two TensorCores
    # both get work (the "parallel" axis shards across cores).
    if B >= 2 * _SUB and _round_up(B, bt) // bt < 2:
        bt = _round_up((B + 1) // 2, _SUB)

    B_pad = _round_up(B, bt)
    if B_pad != B:
        # Ragged tail only (< bt rows). For huge ragged batches prefer a
        # batch_tile that divides B to avoid this extra HBM copy.
        x2d = jnp.pad(x2d, ((0, B_pad - B), (0, 0)))

    grid = (B_pad // bt,)

    out = pl.pallas_call(
        _mlp_kernel,
        out_shape=jax.ShapeDtypeStruct((B_pad, N_OUT_PAD), jnp.float32),
        grid_spec=pltpu.PrefetchScalarGridSpec(
            num_scalar_prefetch=0,
            grid=grid,
            in_specs=[
                pl.BlockSpec((bt, N_IN), lambda i: (i, 0)),          # x tile
                pl.BlockSpec((N_IN, N_HID), lambda i: (0, 0)),       # w1 (invariant)
                pl.BlockSpec((1, N_HID), lambda i: (0, 0)),          # b1
                pl.BlockSpec((N_HID, N_OUT_PAD), lambda i: (0, 0)),  # w2 (lane-padded)
                pl.BlockSpec((1, N_OUT_PAD), lambda i: (0, 0)),      # b2 (lane-padded)
            ],
            out_specs=pl.BlockSpec((bt, N_OUT_PAD), lambda i: (i, 0)),
        ),
        compiler_params=pltpu.CompilerParams(
            dimension_semantics=("parallel",),
            vmem_limit_bytes=32 * 1024 * 1024,  # headroom for big tiles (v5e default is 16 MiB)
        ),
    )(x2d, w1k, b1k, w2k, b2k)

    return out[:B, :N_OUT]


def init_params(key):
    """f32 'master' params mimicking nn.Linear default init, stored (in, out)."""
    k1, k2, k3, k4 = jax.random.split(key, 4)
    bound1 = 1.0 / jnp.sqrt(N_IN)
    bound2 = 1.0 / jnp.sqrt(N_HID)
    w1 = jax.random.uniform(k1, (N_IN, N_HID), jnp.float32, -bound1, bound1)
    b1 = jax.random.uniform(k2, (1, N_HID), jnp.float32, -bound1, bound1)
    w2 = jax.random.uniform(k3, (N_HID, N_OUT), jnp.float32, -bound2, bound2)
    b2 = jax.random.uniform(k4, (1, N_OUT), jnp.float32, -bound2, bound2)
    return w1, b1, w2, b2


def pack_params(w1, b1, w2, b2):
    """Kernel layout: bf16 weights; fc2 weight/bias zero-padded to 128 output lanes."""
    w1k = w1.astype(jnp.bfloat16)
    b1k = b1.astype(jnp.float32)
    w2k = jnp.zeros((N_HID, N_OUT_PAD), jnp.bfloat16).at[:, :N_OUT].set(
        w2.astype(jnp.bfloat16))
    b2k = jnp.zeros((1, N_OUT_PAD), jnp.float32).at[:, :N_OUT].set(b2)
    return w1k, b1k, w2k, b2k


if __name__ == "__main__":
    key = jax.random.PRNGKey(0)
    kx, kp = jax.random.split(key)

    # MNIST-like small batch: (B, 1, 28, 28); B=32 exercises 2 grid steps.
    B = 32
    x = jax.random.normal(kx, (B, 1, 28, 28), jnp.float32)
    w1, b1, w2, b2 = init_params(kp)
    w1k, b1k, w2k, b2k = pack_params(w1, b1, w2, b2)

    out = jax.block_until_ready(simple_nn_forward(x, w1k, b1k, w2k, b2k))

    # Pure-JAX f32 reference (same semantics as the PyTorch forward).
    x2d = x.reshape(-1, N_IN)
    ref = jnp.maximum(x2d @ w1 + b1, 0.0) @ w2 + b2
    assert out.shape == (B, N_OUT)
    # bf16 matmul operands (f32 accumulate) -> looser tolerance vs the f32 reference.
    assert jnp.allclose(out, ref, atol=5e-2, rtol=5e-2), float(
        jnp.max(jnp.abs(out - ref)))

    print("KERNEL_OK")
</pallas_src>

<mosaic_0001>
module attributes {stable_mosaic.version = 11 : i64} {
  func.func @_mlp_kernel(%arg0: i32, %arg1: memref<16x784xbf16, #tpu.memory_space<vmem>>, %arg2: memref<784x512xbf16, #tpu.memory_space<vmem>>, %arg3: memref<1x512xf32, #tpu.memory_space<vmem>>, %arg4: memref<512x128xbf16, #tpu.memory_space<vmem>>, %arg5: memref<1x128xf32, #tpu.memory_space<vmem>>, %arg6: memref<16x128xf32, #tpu.memory_space<vmem>>) attributes {dimension_semantics = [#tpu.dimension_semantics<parallel>], iteration_bounds = array<i64: 2>, scalar_prefetch = 0 : i64, scratch_operands = 0 : i64, tpu.core_type = #tpu.core_type<tc>, window_params = [{transform_indices = @transform_0, window_bounds = array<i64: 16, 784>}, {pipeline_mode = #tpu.pipeline_mode<synchronous>, transform_indices = @transform_1, window_bounds = array<i64: 784, 512>}, {pipeline_mode = #tpu.pipeline_mode<synchronous>, transform_indices = @transform_2, window_bounds = array<i64: 1, 512>}, {pipeline_mode = #tpu.pipeline_mode<synchronous>, transform_indices = @transform_3, window_bounds = array<i64: 512, 128>}, {pipeline_mode = #tpu.pipeline_mode<synchronous>, transform_indices = @transform_4, window_bounds = array<i64: 1, 128>}, {transform_indices = @transform_5, window_bounds = array<i64: 16, 128>}]} {
    %c0 = arith.constant 0 : index
    %c0_0 = arith.constant 0 : index
    %0 = vector.load %arg1[%c0, %c0_0] : memref<16x784xbf16, #tpu.memory_space<vmem>>, vector<16x784xbf16>
    %c0_1 = arith.constant 0 : index
    %c0_2 = arith.constant 0 : index
    %1 = vector.load %arg2[%c0_1, %c0_2] : memref<784x512xbf16, #tpu.memory_space<vmem>>, vector<784x512xbf16>
    %cst = arith.constant dense<0.000000e+00> : vector<16x512xf32>
    %2 = tpu.matmul %0, %1, %cst {dimension_numbers = #tpu.dot_dimension_numbers<[1], [0], [0], [1], [0, 0, 1, 1], [], []>} : vector<16x784xbf16>, vector<784x512xbf16>, vector<16x512xf32> -> vector<16x512xf32>
    %c0_3 = arith.constant 0 : index
    %c0_4 = arith.constant 0 : index
    %3 = vector.load %arg3[%c0_3, %c0_4] : memref<1x512xf32, #tpu.memory_space<vmem>>, vector<1x512xf32>
    %4 = vector.broadcast %3 : vector<1x512xf32> to vector<16x512xf32>
    %5 = arith.addf %2, %4 : vector<16x512xf32>
    %cst_5 = arith.constant 0.000000e+00 : f32
    %6 = vector.broadcast %cst_5 : f32 to vector<16x512xf32>
    %7 = arith.maximumf %5, %6 : vector<16x512xf32>
    %8 = arith.truncf %7 : vector<16x512xf32> to vector<16x512xbf16>
    %c0_6 = arith.constant 0 : index
    %c0_7 = arith.constant 0 : index
    %9 = vector.load %arg4[%c0_6, %c0_7] : memref<512x128xbf16, #tpu.memory_space<vmem>>, vector<512x128xbf16>
    %cst_8 = arith.constant dense<0.000000e+00> : vector<16x128xf32>
    %10 = tpu.matmul %8, %9, %cst_8 {dimension_numbers = #tpu.dot_dimension_numbers<[1], [0], [0], [1], [0, 0, 1, 1], [], []>} : vector<16x512xbf16>, vector<512x128xbf16>, vector<16x128xf32> -> vector<16x128xf32>
    %c0_9 = arith.constant 0 : index
    %c0_10 = arith.constant 0 : index
    %11 = vector.load %arg5[%c0_9, %c0_10] : memref<1x128xf32, #tpu.memory_space<vmem>>, vector<1x128xf32>
    %12 = vector.broadcast %11 : vector<1x128xf32> to vector<16x128xf32>
    %13 = arith.addf %10, %12 : vector<16x128xf32>
    %c0_11 = arith.constant 0 : index
    %c0_12 = arith.constant 0 : index
    %14 = vector.load %arg6[%c0_11, %c0_12] : memref<16x128xf32, #tpu.memory_space<vmem>>, vector<16x128xf32>
    tpu.vector_store %arg6[%c0_11, %c0_12], %13 {strides = array<i32>} : memref<16x128xf32, #tpu.memory_space<vmem>>, vector<16x128xf32>,
    return
  }
  func.func @transform_0(%arg0: i32) -> (i32, i32) {
    %c0_i32 = arith.constant 0 : i32
    %c0_i32_0 = arith.constant 0 : i32
    return %arg0, %c0_i32 : i32, i32
  }
  func.func @transform_1(%arg0: i32) -> (i32, i32) {
    %c0_i32 = arith.constant 0 : i32
    %c0_i32_0 = arith.constant 0 : i32
    %c0_i32_1 = arith.constant 0 : i32
    return %c0_i32, %c0_i32_0 : i32, i32
  }
  func.func @transform_2(%arg0: i32) -> (i32, i32) {
    %c0_i32 = arith.constant 0 : i32
    %c0_i32_0 = arith.constant 0 : i32
    %c0_i32_1 = arith.constant 0 : i32
    return %c0_i32, %c0_i32_0 : i32, i32
  }
  func.func @transform_3(%arg0: i32) -> (i32, i32) {
    %c0_i32 = arith.constant 0 : i32
    %c0_i32_0 = arith.constant 0 : i32
    %c0_i32_1 = arith.constant 0 : i32
    return %c0_i32, %c0_i32_0 : i32, i32
  }
  func.func @transform_4(%arg0: i32) -> (i32, i32) {
    %c0_i32 = arith.constant 0 : i32
    %c0_i32_0 = arith.constant 0 : i32
    %c0_i32_1 = arith.constant 0 : i32
    return %c0_i32, %c0_i32_0 : i32, i32
  }
  func.func @transform_5(%arg0: i32) -> (i32, i32) {
    %c0_i32 = arith.constant 0 : i32
    %c0_i32_0 = arith.constant 0 : i32
    return %arg0, %c0_i32 : i32, i32
  }
}

</mosaic_0001>

<llo_original>
// kernel: tpu_custom_call.1
$region0: #{tpu_custom_call.1}
  #allocation0 [shape = 'u32[]', space=smem, size = 0x4, offset = 0x4, fixed_abs, tag = 'smem constant byte address 0x4 - core index']
  #allocation1 [shape = 'u32[144,128]{1,0:T(1,128)}', space=vmem, size = 0x12000, scoped, tag = 'internal scratch']
  %s0 = inlined_call_operand.hbm [shape: bf16[32,784], index: 0, kind: input, shape index: {}]
  %s1 = inlined_call_operand.hbm [shape: bf16[784,512], index: 1, kind: input, shape index: {}]
  %s2 = inlined_call_operand.vmem [shape: f32[1,512], index: 2, kind: input, shape index: {}]
  %s3 = inlined_call_operand.hbm [shape: bf16[512,128], index: 3, kind: input, shape index: {}]
  %s4 = inlined_call_operand.vmem [shape: f32[1,128], index: 4, kind: input, shape index: {}]
  %s5 = inlined_call_operand.hbm [shape: f32[32,128], index: 5, kind: output, shape index: {}]
  %s6 = sld [smem:[#allocation0]]
  $region65: #{tpu_custom_call.1} parent=0
    _
  %s8 = ssub.s32 1, %s6
  %s9 = scalar_select 0, %s8, %s6
  $region1: #{tpu_custom_call.1} parent=0
    #allocation2 [shape = 'u8[57344]{0}', space=vmem, size = 0xe000, scoped, tag = 'input window, operand 0']
    #allocation3 [shape = 's32[2]{0}', space=sflag, size = 0x8, scoped, tag = 'scoped memory for tpu_custom_call.1']
    #allocation4 [shape = 's32[2]{0}', space=sflag, size = 0x8, scoped, tag = 'scoped memory for tpu_custom_call.1']
    #allocation5 [shape = 'u8[802816]{0}', space=vmem, size = 0xc4000, scoped, tag = 'input window, operand 1, single buffered']
    #allocation6 [shape = 's32[1]{0}', space=sflag, size = 0x4, scoped, tag = 'scoped memory for tpu_custom_call.1']
    #allocation7 [shape = 'u8[131072]{0}', space=vmem, size = 0x20000, scoped, tag = 'input window, operand 3, single buffered']
    #allocation8 [shape = 'u8[16384]{0}', space=vmem, size = 0x4000, scoped, tag = 'output window, operand 0']
    %10 = vsyncpa [#allocation3], 0
    %s11 = scalar_lea.sflag [#allocation3], 1
    %12 = vsyncpa %s11, 0
    %13 = vsyncpa [#allocation6], 0
    %14 = vsyncpa [#allocation4], 0
    %s15 = scalar_lea.sflag [#allocation4], 1
    %16 = vsyncpa %s15, 0
    loop: start=0, step=1, limit=4
    $region2: #{tpu_custom_call.1} parent=1 // loop_pre_header
      _
    $region3: #{tpu_custom_call.1} parent=1 // loop_header
      %s18 = sphi 0, %s22
      %p19 = scmp.ge.s32.totalorder %s18, 4
      %s28 = sphi 0, %s30
      %s31 = sphi 0, %s28
      %s32 = sphi 0, %s31
      %s48 = sphi 0, %s32
      %s52 = sphi 0, %s52
      %s54 = sphi 0, %s52
      %s55 = sphi 0, %s54
      %s69 = sphi 0, %s55
      %s73 = sphi 0, %s73
      %s75 = sphi 0, %s73
      %s76 = sphi 0, %s75
      %s90 = sphi 0, %s76
      %s94 = sphi 0, %s94
      %s96 = sphi 0, %s94
      %s97 = sphi 0, %s96
      %s111 = sphi 0, %s97
      %s115 = sphi 0, %s115
      %s117 = sphi 0, %s115
      %s118 = sphi 0, %s117
      %s132 = sphi 0, %s118
      %s138 = sphi 0, %s140
      %s141 = sphi 0, %s138
      %s142 = sphi 0, %s141
      %s158 = sphi 0, %s142
    $region4: #{tpu_custom_call.1} parent=1 // loop_header_branch
      %21 = sbr.rel (%p19) target = $region8
    $region5: #{tpu_custom_call.1} parent=1 // loop_body
      %s23 = ssub.s32 %s18, 1
      %s24 = ssub.s32 %s18, 2
      %s25 = sadd.s32 %s18, 1
      %s26 = ssub.s32 %s18, %s25
      %p27 = scmp.eq.s32.totalorder %s26, 0
      %s29 = sadd.s32 %s28, 1
      %s30 = scalar_select %p27, %s28, %s29
      %p33 = pneg %p27
      %p34 = scmp.eq.s32.totalorder %s18, 1
      %p35 = por %p33, %p34
      %p36 = scmp.ne.s32.totalorder %s28, %s31
      %p37 = scmp.eq.s32.totalorder %s18, 0
      %p38 = por %p36, %p37
      %p39 = scmp.ne.s32.totalorder %s28, %s31
      %p40 = scmp.eq.s32.totalorder %s23, 1
      %p41 = por %p39, %p40
      %p42 = scmp.ne.s32.totalorder %s31, %s32
      %p43 = scmp.eq.s32.totalorder %s23, 0
      %p44 = por %p42, %p43
      %p45 = scmp.ne.s32.totalorder %s31, %s32
      %p46 = scmp.eq.s32.totalorder %s24, 1
      %p47 = por %p45, %p46
      %p49 = scmp.ne.s32.totalorder %s32, %s48
      %p50 = scmp.eq.s32.totalorder %s24, 0
      %p51 = por %p49, %p50
      %s53 = sadd.s32 %s52, 1
      %p56 = scmp.eq.s32.totalorder %s18, 1
      %p57 = scmp.ne.s32.totalorder %s52, %s54
      %p58 = scmp.eq.s32.totalorder %s18, 0
      %p59 = por %p57, %p58
      %p60 = scmp.ne.s32.totalorder %s52, %s54
      %p61 = scmp.eq.s32.totalorder %s23, 1
      %p62 = por %p60, %p61
      %p63 = scmp.ne.s32.totalorder %s54, %s55
      %p64 = scmp.eq.s32.totalorder %s23, 0
      %p65 = por %p63, %p64
      %p66 = scmp.ne.s32.totalorder %s54, %s55
      %p67 = scmp.eq.s32.totalorder %s24, 1
      %p68 = por %p66, %p67
      %p70 = scmp.ne.s32.totalorder %s55, %s69
      %p71 = scmp.eq.s32.totalorder %s24, 0
      %p72 = por %p70, %p71
      %s74 = sadd.s32 %s73, 1
      %p77 = scmp.eq.s32.totalorder %s18, 1
      %p78 = scmp.ne.s32.totalorder %s73, %s75
      %p79 = scmp.eq.s32.totalorder %s18, 0
      %p80 = por %p78, %p79
      %p81 = scmp.ne.s32.totalorder %s73, %s75
      %p82 = scmp.eq.s32.totalorder %s23, 1
      %p83 = por %p81, %p82
      %p84 = scmp.ne.s32.totalorder %s75, %s76
      %p85 = scmp.eq.s32.totalorder %s23, 0
      %p86 = por %p84, %p85
      %p87 = scmp.ne.s32.totalorder %s75, %s76
      %p88 = scmp.eq.s32.totalorder %s24, 1
      %p89 = por %p87, %p88
      %p91 = scmp.ne.s32.totalorder %s76, %s90
      %p92 = scmp.eq.s32.totalorder %s24, 0
      %p93 = por %p91, %p92
      %s95 = sadd.s32 %s94, 1
      %p98 = scmp.eq.s32.totalorder %s18, 1
      %p99 = scmp.ne.s32.totalorder %s94, %s96
      %p100 = scmp.eq.s32.totalorder %s18, 0
      %p101 = por %p99, %p100
      %p102 = scmp.ne.s32.totalorder %s94, %s96
      %p103 = scmp.eq.s32.totalorder %s23, 1
      %p104 = por %p102, %p103
      %p105 = scmp.ne.s32.totalorder %s96, %s97
      %p106 = scmp.eq.s32.totalorder %s23, 0
      %p107 = por %p105, %p106
      %p108 = scmp.ne.s32.totalorder %s96, %s97
      %p109 = scmp.eq.s32.totalorder %s24, 1
      %p110 = por %p108, %p109
      %p112 = scmp.ne.s32.totalorder %s97, %s111
      %p113 = scmp.eq.s32.totalorder %s24, 0
      %p114 = por %p112, %p113
      %s116 = sadd.s32 %s115, 1
      %p119 = scmp.eq.s32.totalorder %s18, 1
      %p120 = scmp.ne.s32.totalorder %s115, %s117
      %p121 = scmp.eq.s32.totalorder %s18, 0
      %p122 = por %p120, %p121
      %p123 = scmp.ne.s32.totalorder %s115, %s117
      %p124 = scmp.eq.s32.totalorder %s23, 1
      %p125 = por %p123, %p124
      %p126 = scmp.ne.s32.totalorder %s117, %s118
      %p127 = scmp.eq.s32.totalorder %s23, 0
      %p128 = por %p126, %p127
      %p129 = scmp.ne.s32.totalorder %s117, %s118
      %p130 = scmp.eq.s32.totalorder %s24, 1
      %p131 = por %p129, %p130
      %p133 = scmp.ne.s32.totalorder %s118, %s132
      %p134 = scmp.eq.s32.totalorder %s24, 0
      %p135 = por %p133, %p134
      %s136 = ssub.s32 %s18, %s25
      %p137 = scmp.eq.s32.totalorder %s136, 0
      %s139 = sadd.s32 %s138, 1
      %s140 = scalar_select %p137, %s138, %s139
      %p143 = pneg %p137
      %p144 = scmp.eq.s32.totalorder %s18, 1
      %p145 = por %p143, %p144
      %p146 = scmp.ne.s32.totalorder %s138, %s141
      %p147 = scmp.eq.s32.totalorder %s18, 0
      %p148 = por %p146, %p147
      %p149 = scmp.ne.s32.totalorder %s138, %s141
      %p150 = scmp.eq.s32.totalorder %s23, 1
      %p151 = por %p149, %p150
      %p152 = scmp.ne.s32.totalorder %s141, %s142
      %p153 = scmp.eq.s32.totalorder %s23, 0
      %p154 = por %p152, %p153
      %p155 = scmp.ne.s32.totalorder %s141, %s142
      %p156 = scmp.eq.s32.totalorder %s24, 1
      %p157 = por %p155, %p156
      %p159 = scmp.ne.s32.totalorder %s142, %s158
      %p160 = scmp.eq.s32.totalorder %s24, 0
      %p161 = por %p159, %p160
      %p162 = scmp.le.s32.totalorder 1, %s18
      %p163 = scmp.lt.s32.totalorder %s18, 3
      %p164 = pnand %p162, %p163
      %p165 = pneg %p164
      // Predicated region
      $region9: #{tpu_custom_call.1} parent=5 // pred_check
        _
      $region10: #{tpu_custom_call.1} parent=5 // pred_check_branch
        %167 = sbr.rel (%p164) target = $region12
      $region11: #{tpu_custom_call.1} parent=5 // pred_region
        %s168 = ssub.s32 %s18, 1
        // Predicated region
        $region13: #{tpu_custom_call.1} parent=11 // pred_check
          %p169 = pneg %p65
        $region14: #{tpu_custom_call.1} parent=11 // pred_check_branch
          %171 = sbr.rel (%p169) target = $region16
        $region15: #{tpu_custom_call.1} parent=11 // pred_region
          %s173 = ssub.s32 25088, 25088
          %174 = vsyncadd [#allocation6], %s173
          %s175 = sshll.u32 [#allocation5], 4
          %s176 = int_to_ptr.vmem [resolvable:$true] %s175
          %181 = dma.hbm_to_vmem [thread:$0]  %s1, 25088, %s176, [#allocation6], 256, 256, 16
        $region16: #{tpu_custom_call.1} parent=11 // pred_fallthru
          _
        // Predicated region
        $region17: #{tpu_custom_call.1} parent=11 // pred_check
          %p182 = pneg %p86
        $region18: #{tpu_custom_call.1} parent=11 // pred_check_branch
          %184 = sbr.rel (%p182) target = $region20
        $region19: #{tpu_custom_call.1} parent=11 // pred_region
          _
        $region20: #{tpu_custom_call.1} parent=11 // pred_fallthru
          _
        // Predicated region
        $region21: #{tpu_custom_call.1} parent=11 // pred_check
          %p185 = pneg %p107
        $region22: #{tpu_custom_call.1} parent=11 // pred_check_branch
          %187 = sbr.rel (%p185) target = $region24
        $region23: #{tpu_custom_call.1} parent=11 // pred_region
          %s189 = ssub.s32 4096, 4096
          %190 = vsyncadd [#allocation6], %s189
          %s191 = sshll.u32 [#allocation7], 4
          %s192 = int_to_ptr.vmem [resolvable:$true] %s191
          %197 = dma.hbm_to_vmem [thread:$0]  %s3, 4096, %s192, [#allocation6], 64, 64, 4
        $region24: #{tpu_custom_call.1} parent=11 // pred_fallthru
          _
        // Predicated region
        $region25: #{tpu_custom_call.1} parent=11 // pred_check
          %p198 = pneg %p128
        $region26: #{tpu_custom_call.1} parent=11 // pred_check_branch
          %200 = sbr.rel (%p198) target = $region28
        $region27: #{tpu_custom_call.1} parent=11 // pred_region
          _
        $region28: #{tpu_custom_call.1} parent=11 // pred_fallthru
          _
      $region12: #{tpu_custom_call.1} parent=5 // pred_fallthru
        _
      %p201 = scmp.lt.s32.totalorder %s18, 2
      // Predicated region
      $region29: #{tpu_custom_call.1} parent=5 // pred_check
        %p202 = pneg %p201
      $region30: #{tpu_custom_call.1} parent=5 // pred_check_branch
        %204 = sbr.rel (%p202) target = $region32
      $region31: #{tpu_custom_call.1} parent=5 // pred_region
        // Predicated region
        $region33: #{tpu_custom_call.1} parent=31 // pred_check
          %p205 = pneg %p38
        $region34: #{tpu_custom_call.1} parent=31 // pred_check_branch
          %207 = sbr.rel (%p205) target = $region36
        $region35: #{tpu_custom_call.1} parent=31 // pred_region
          %s208 = sand.u32 %s28, 1
          %s209 = scalar_lea.sflag [#allocation3], %s208
          %s210 = sand.u32 %s28, 1
          %s211 = smul.addr %s210, 56
          %s212 = scalar_lea.vmem [#allocation2], %s211
          %s213 = smul.u32 2, %s18
          %s215 = ssub.s32 896, 896
          %216 = vsyncadd %s209, %s215
          %s217 = smul.addr %s213, 7
          %s218 = smul.addr %s217, 64
          %s219 = scalar_lea.hbm %s0, %s218
          %s220 = sshll.u32 %s212, 4
          %s221 = int_to_ptr.vmem [resolvable:$true] %s220
          %226 = dma.hbm_to_vmem [thread:$0]  %s219, 896, %s221, %s209, 448, 448, 28
        $region36: #{tpu_custom_call.1} parent=31 // pred_fallthru
          _
      $region32: #{tpu_custom_call.1} parent=5 // pred_fallthru
        _
      %p227 = scmp.le.s32.totalorder 1, %s18
      %p228 = scmp.lt.s32.totalorder %s18, 3
      %p229 = pnand %p227, %p228
      %p230 = pneg %p229
      // Predicated region
      $region37: #{tpu_custom_call.1} parent=5 // pred_check
        _
      $region38: #{tpu_custom_call.1} parent=5 // pred_check_branch
        %232 = sbr.rel (%p229) target = $region40
      $region39: #{tpu_custom_call.1} parent=5 // pred_region
        %s233 = ssub.s32 %s18, 1
        %s234 = sand.u32 %s31, 1
        %s235 = scalar_lea.sflag [#allocation3], %s234
        %s236 = sand.u32 %s31, 1
        %s237 = smul.addr %s236, 56
        %s238 = scalar_lea.vmem [#allocation2], %s237
        // Predicated region
        $region41: #{tpu_custom_call.1} parent=39 // pred_check
          %p239 = pneg %p44
        $region42: #{tpu_custom_call.1} parent=39 // pred_check_branch
          %241 = sbr.rel (%p239) target = $region44
        $region43: #{tpu_custom_call.1} parent=39 // pred_region
          %242 = dma.done %s235, 896
        $region44: #{tpu_custom_call.1} parent=39 // pred_fallthru
          _
        // Predicated region
        $region45: #{tpu_custom_call.1} parent=39 // pred_check
          %p243 = pneg %p65
        $region46: #{tpu_custom_call.1} parent=39 // pred_check_branch
          %245 = sbr.rel (%p243) target = $region48
        $region47: #{tpu_custom_call.1} parent=39 // pred_region
          %246 = dma.done [#allocation6], 25088
        $region48: #{tpu_custom_call.1} parent=39 // pred_fallthru
          _
        // Predicated region
        $region49: #{tpu_custom_call.1} parent=39 // pred_check
          %p247 = pneg %p107
        $region50: #{tpu_custom_call.1} parent=39 // pred_check_branch
          %249 = sbr.rel (%p247) target = $region52
        $region51: #{tpu_custom_call.1} parent=39 // pred_region
          %250 = dma.done [#allocation6], 4096
        $region52: #{tpu_custom_call.1} parent=39 // pred_fallthru
          _
        %s251 = sand.u32 %s31, 1
        %s252 = scalar_lea.sflag [#allocation3], %s251
        %s253 = sand.u32 %s31, 1
        %s254 = smul.addr %s253, 56
        %s255 = scalar_lea.vmem [#allocation2], %s254
        %p256 = pneg %p44
        %p257 = pneg %p41
        %p258 = pneg %p65
        %p259 = pneg %p62
        %p260 = pneg %p86
        %p261 = pneg %p83
        %p262 = pneg %p107
        %p263 = pneg %p104
        %p264 = pneg %p128
        %p265 = pneg %p125
        %p266 = pneg %p154
        %p267 = pneg %p151
        %s268 = sand.u32 %s141, 1
        %s269 = scalar_lea.sflag [#allocation4], %s268
        %s270 = sand.u32 %s141, 1
        %s271 = smul.addr %s270, 16
        %s272 = scalar_lea.vmem [#allocation8], %s271
        %s273 = smul.u32 2, %s23
        %s274 = smul.u32 2, %s23
        %v276 = vld [vmem:[%s238] sm:$0xff]
        %v277 = vld [vmem:[%s238 + $0x8] sm:$0xff]
        %v278 = vld [vmem:[%s238 + $0x10] sm:$0xff]
        %v279 = vld [vmem:[%s238 + $0x18] sm:$0xf]
        %v280 = vld [vmem:[%s238 + $0x1c] sm:$0xff]
        %v281 = vld [vmem:[%s238 + $0x24] sm:$0xff]
        %v282 = vld [vmem:[%s238 + $0x2c] sm:$0xff]
        %v283 = vld [vmem:[%s238 + $0x34] sm:$0xf]
        %v284 = vld [vmem:[#allocation5] sm:$0xff]
        %v285 = vld [vmem:[#allocation5 + $0x8] sm:$0xff]
        %v286 = vld [vmem:[#allocation5 + $0x10] sm:$0xff]
        %v287 = vld [vmem:[#allocation5 + $0x18] sm:$0xff]
        %v288 = vld [vmem:[#allocation5 + $0x20] sm:$0xff]
        %v289 = vld [vmem:[#allocation5 + $0x28] sm:$0xff]
        %v290 = vld [vmem:[#allocation5 + $0x30] sm:$0xff]
        %v291 = vld [vmem:[#allocation5 + $0x38] sm:$0xff]
        %v292 = vld [vmem:[#allocation5 + $0x40] sm:$0xff]
        %v293 = vld [vmem:[#allocation5 + $0x48] sm:$0xff]
        %v294 = vld [vmem:[#allocation5 + $0x50] sm:$0xff]
        %v295 = vld [vmem:[#allocation5 + $0x58] sm:$0xff]
        %v296 = vld [vmem:[#allocation5 + $0x60] sm:$0xff]
        %v297 = vld [vmem:[#allocation5 + $0x68] sm:$0xff]
        %v298 = vld [vmem:[#allocation5 + $0x70] sm:$0xff]
        %v299 = vld [vmem:[#allocation5 + $0x78] sm:$0xff]
        %v300 = vld [vmem:[#allocation5 + $0x80] sm:$0xff]
        %v301 = vld [vmem:[#allocation5 + $0x88] sm:$0xff]
        %v302 = vld [vmem:[#allocation5 + $0x90] sm:$0xff]
        %v303 = vld [vmem:[#allocation5 + $0x98] sm:$0xff]
        %v304 = vld [vmem:[#allocation5 + $0xa0] sm:$0xff]
        %v305 = vld [vmem:[#allocation5 + $0xa8] sm:$0xff]
        %v306 = vld [vmem:[#allocation5 + $0xb0] sm:$0xff]
        %v307 = vld [vmem:[#allocation5 + $0xb8] sm:$0xff]
        %v308 = vld [vmem:[#allocation5 + $0xc0] sm:$0xff]
        %v309 = vld [vmem:[#allocation5 + $0xc8] sm:$0xff]
        %v310 = vld [vmem:[#allocation5 + $0xd0] sm:$0xff]
        %v311 = vld [vmem:[#allocation5 + $0xd8] sm:$0xff]
        %v312 = vld [vmem:[#allocation5 + $0xe0] sm:$0xff]
        %v313 = vld [vmem:[#allocation5 + $0xe8] sm:$0xff]
        %v314 = vld [vmem:[#allocation5 + $0xf0] sm:$0xff]
        %v315 = vld [vmem:[#allocation5 + $0xf8] sm:$0xff]
        %v316 = vld [vmem:[#allocation5 + $0x100] sm:$0xff]
        %v317 = vld [vmem:[#allocation5 + $0x108] sm:$0xff]
        %v318 = vld [vmem:[#allocation5 + $0x110] sm:$0xff]
        %v319 = vld [vmem:[#allocation5 + $0x118] sm:$0xff]
        %v320 = vld [vmem:[#allocation5 + $0x120] sm:$0xff]
        %v321 = vld [vmem:[#allocation5 + $0x128] sm:$0xff]
        %v322 = vld [vmem:[#allocation5 + $0x130] sm:$0xff]
        %v323 = vld [vmem:[#allocation5 + $0x138] sm:$0xff]
        %v324 = vld [vmem:[#allocation5 + $0x140] sm:$0xff]
        %v325 = vld [vmem:[#allocation5 + $0x148] sm:$0xff]
        %v326 = vld [vmem:[#allocation5 + $0x150] sm:$0xff]
        %v327 = vld [vmem:[#allocation5 + $0x158] sm:$0xff]
        %v328 = vld [vmem:[#allocation5 + $0x160] sm:$0xff]
        %v329 = vld [vmem:[#allocation5 + $0x168] sm:$0xff]
        %v330 = vld [vmem:[#allocation5 + $0x170] sm:$0xff]
        %v331 = vld [vmem:[#allocation5 + $0x178] sm:$0xff]
        %v332 = vld [vmem:[#allocation5 + $0x180] sm:$0xff]
        %v333 = vld [vmem:[#allocation5 + $0x188] sm:$0xff]
        %v334 = vld [vmem:[#allocation5 + $0x190] sm:$0xff]
        %v335 = vld [vmem:[#allocation5 + $0x198] sm:$0xff]
        %v336 = vld [vmem:[#allocation5 + $0x1a0] sm:$0xff]
        %v337 = vld [vmem:[#allocation5 + $0x1a8] sm:$0xff]
        %v338 = vld [vmem:[#allocation5 + $0x1b0] sm:$0xff]
        %v339 = vld [vmem:[#allocation5 + $0x1b8] sm:$0xff]
        %v340 = vld [vmem:[#allocation5 + $0x1c0] sm:$0xff]
        %v341 = vld [vmem:[#allocation5 + $0x1c8] sm:$0xff]
        %v342 = vld [vmem:[#allocation5 + $0x1d0] sm:$0xff]
        %v343 = vld [vmem:[#allocation5 + $0x1d8] sm:$0xff]
        %v344 = vld [vmem:[#allocation5 + $0x1e0] sm:$0xff]
        %v345 = vld [vmem:[#allocation5 + $0x1e8] sm:$0xff]
        %v346 = vld [vmem:[#allocation5 + $0x1f0] sm:$0xff]
        %v347 = vld [vmem:[#allocation5 + $0x1f8] sm:$0xff]
        %v348 = vld [vmem:[#allocation5 + $0x200] sm:$0xff]
        %v349 = vld [vmem:[#allocation5 + $0x208] sm:$0xff]
        %v350 = vld [vmem:[#allocation5 + $0x210] sm:$0xff]
        %v351 = vld [vmem:[#allocation5 + $0x218] sm:$0xff]
        %v352 = vld [vmem:[#allocation5 + $0x220] sm:$0xff]
        %v353 = vld [vmem:[#allocation5 + $0x228] sm:$0xff]
        %v354 = vld [vmem:[#allocation5 + $0x230] sm:$0xff]
        %v355 = vld [vmem:[#allocation5 + $0x238] sm:$0xff]
        %v356 = vld [vmem:[#allocation5 + $0x240] sm:$0xff]
        %v357 = vld [vmem:[#allocation5 + $0x248] sm:$0xff]
        %v358 = vld [vmem:[#allocation5 + $0x250] sm:$0xff]
        %v359 = vld [vmem:[#allocation5 + $0x258] sm:$0xff]
        %v360 = vld [vmem:[#allocation5 + $0x260] sm:$0xff]
        %v361 = vld [vmem:[#allocation5 + $0x268] sm:$0xff]
        %v362 = vld [vmem:[#allocation5 + $0x270] sm:$0xff]
        %v363 = vld [vmem:[#allocation5 + $0x278] sm:$0xff]
        %v364 = vld [vmem:[#allocation5 + $0x280] sm:$0xff]
        %v365 = vld [vmem:[#allocation5 + $0x288] sm:$0xff]
        %v366 = vld [vmem:[#allocation5 + $0x290] sm:$0xff]
        %v367 = vld [vmem:[#allocation5 + $0x298] sm:$0xff]
        %v368 = vld [vmem:[#allocation5 + $0x2a0] sm:$0xff]
        %v369 = vld [vmem:[#allocation5 + $0x2a8] sm:$0xff]
        %v370 = vld [vmem:[#allocation5 + $0x2b0] sm:$0xff]
        %v371 = vld [vmem:[#allocation5 + $0x2b8] sm:$0xff]
        %v372 = vld [vmem:[#allocation5 + $0x2c0] sm:$0xff]
        %v373 = vld [vmem:[#allocation5 + $0x2c8] sm:$0xff]
        %v374 = vld [vmem:[#allocation5 + $0x2d0] sm:$0xff]
        %v375 = vld [vmem:[#allocation5 + $0x2d8] sm:$0xff]
        %v376 = vld [vmem:[#allocation5 + $0x2e0] sm:$0xff]
        %v377 = vld [vmem:[#allocation5 + $0x2e8] sm:$0xff]
        %v378 = vld [vmem:[#allocation5 + $0x2f0] sm:$0xff]
        %v379 = vld [vmem:[#allocation5 + $0x2f8] sm:$0xff]
        %v380 = vld [vmem:[#allocation5 + $0x300] sm:$0xff]
        %v381 = vld [vmem:[#allocation5 + $0x308] sm:$0xff]
        %v382 = vld [vmem:[#allocation5 + $0x310] sm:$0xff]
        %v383 = vld [vmem:[#allocation5 + $0x318] sm:$0xff]
        %v384 = vld [vmem:[#allocation5 + $0x320] sm:$0xff]
        %v385 = vld [vmem:[#allocation5 + $0x328] sm:$0xff]
        %v386 = vld [vmem:[#allocation5 + $0x330] sm:$0xff]
        %v387 = vld [vmem:[#allocation5 + $0x338] sm:$0xff]
        %v388 = vld [vmem:[#allocation5 + $0x340] sm:$0xff]
        %v389 = vld [vmem:[#allocation5 + $0x348] sm:$0xff]
        %v390 = vld [vmem:[#allocation5 + $0x350] sm:$0xff]
        %v391 = vld [vmem:[#allocation5 + $0x358] sm:$0xff]
        %v392 = vld [vmem:[#allocation5 + $0x360] sm:$0xff]
        %v393 = vld [vmem:[#allocation5 + $0x368] sm:$0xff]
        %v394 = vld [vmem:[#allocation5 + $0x370] sm:$0xff]
        %v395 = vld [vmem:[#allocation5 + $0x378] sm:$0xff]
        %v396 = vld [vmem:[#allocation5 + $0x380] sm:$0xff]
        %v397 = vld [vmem:[#allocation5 + $0x388] sm:$0xff]
        %v398 = vld [vmem:[#allocation5 + $0x390] sm:$0xff]
        %v399 = vld [vmem:[#allocation5 + $0x398] sm:$0xff]
        %v400 = vld [vmem:[#allocation5 + $0x3a0] sm:$0xff]
        %v401 = vld [vmem:[#allocation5 + $0x3a8] sm:$0xff]
        %v402 = vld [vmem:[#allocation5 + $0x3b0] sm:$0xff]
        %v403 = vld [vmem:[#allocation5 + $0x3b8] sm:$0xff]
        %v404 = vld [vmem:[#allocation5 + $0x3c0] sm:$0xff]
        %v405 = vld [vmem:[#allocation5 + $0x3c8] sm:$0xff]
        %v406 = vld [vmem:[#allocation5 + $0x3d0] sm:$0xff]
        %v407 = vld [vmem:[#allocation5 + $0x3d8] sm:$0xff]
        %v408 = vld [vmem:[#allocation5 + $0x3e0] sm:$0xff]
        %v409 = vld [vmem:[#allocation5 + $0x3e8] sm:$0xff]
        %v410 = vld [vmem:[#allocation5 + $0x3f0] sm:$0xff]
        %v411 = vld [vmem:[#allocation5 + $0x3f8] sm:$0xff]
        %v412 = vld [vmem:[#allocation5 + $0x400] sm:$0xff]
        %v413 = vld [vmem:[#allocation5 + $0x408] sm:$0xff]
        %v414 = vld [vmem:[#allocation5 + $0x410] sm:$0xff]
        %v415 = vld [vmem:[#allocation5 + $0x418] sm:$0xff]
        %v416 = vld [vmem:[#allocation5 + $0x420] sm:$0xff]
        %v417 = vld [vmem:[#allocation5 + $0x428] sm:$0xff]
        %v418 = vld [vmem:[#allocation5 + $0x430] sm:$0xff]
        %v419 = vld [vmem:[#allocation5 + $0x438] sm:$0xff]
        %v420 = vld [vmem:[#allocation5 + $0x440] sm:$0xff]
        %v421 = vld [vmem:[#allocation5 + $0x448] sm:$0xff]
        %v422 = vld [vmem:[#allocation5 + $0x450] sm:$0xff]
        %v423 = vld [vmem:[#allocation5 + $0x458] sm:$0xff]
        %v424 = vld [vmem:[#allocation5 + $0x460] sm:$0xff]
        %v425 = vld [vmem:[#allocation5 + $0x468] sm:$0xff]
        %v426 = vld [vmem:[#allocation5 + $0x470] sm:$0xff]
        %v427 = vld [vmem:[#allocation5 + $0x478] sm:$0xff]
        %v428 = vld [vmem:[#allocation5 + $0x480] sm:$0xff]
        %v429 = vld [vmem:[#allocation5 + $0x488] sm:$0xff]
        %v430 = vld [vmem:[#allocation5 + $0x490] sm:$0xff]
        %v431 = vld [vmem:[#allocation5 + $0x498] sm:$0xff]
        %v432 = vld [vmem:[#allocation5 + $0x4a0] sm:$0xff]
        %v433 = vld [vmem:[#allocation5 + $0x4a8] sm:$0xff]
        %v434 = vld [vmem:[#allocation5 + $0x4b0] sm:$0xff]
        %v435 = vld [vmem:[#allocation5 + $0x4b8] sm:$0xff]
        %v436 = vld [vmem:[#allocation5 + $0x4c0] sm:$0xff]
        %v437 = vld [vmem:[#allocation5 + $0x4c8] sm:$0xff]
        %v438 = vld [vmem:[#allocation5 + $0x4d0] sm:$0xff]
        %v439 = vld [vmem:[#allocation5 + $0x4d8] sm:$0xff]
        %v440 = vld [vmem:[#allocation5 + $0x4e0] sm:$0xff]
        %v441 = vld [vmem:[#allocation5 + $0x4e8] sm:$0xff]
        %v442 = vld [vmem:[#allocation5 + $0x4f0] sm:$0xff]
        %v443 = vld [vmem:[#allocation5 + $0x4f8] sm:$0xff]
        %v444 = vld [vmem:[#allocation5 + $0x500] sm:$0xff]
        %v445 = vld [vmem:[#allocation5 + $0x508] sm:$0xff]
        %v446 = vld [vmem:[#allocation5 + $0x510] sm:$0xff]
        %v447 = vld [vmem:[#allocation5 + $0x518] sm:$0xff]
        %v448 = vld [vmem:[#allocation5 + $0x520] sm:$0xff]
        %v449 = vld [vmem:[#allocation5 + $0x528] sm:$0xff]
        %v450 = vld [vmem:[#allocation5 + $0x530] sm:$0xff]
        %v451 = vld [vmem:[#allocation5 + $0x538] sm:$0xff]
        %v452 = vld [vmem:[#allocation5 + $0x540] sm:$0xff]
        %v453 = vld [vmem:[#allocation5 + $0x548] sm:$0xff]
        %v454 = vld [vmem:[#allocation5 + $0x550] sm:$0xff]
        %v455 = vld [vmem:[#allocation5 + $0x558] sm:$0xff]
        %v456 = vld [vmem:[#allocation5 + $0x560] sm:$0xff]
        %v457 = vld [vmem:[#allocation5 + $0x568] sm:$0xff]
        %v458 = vld [vmem:[#allocation5 + $0x570] sm:$0xff]
        %v459 = vld [vmem:[#allocation5 + $0x578] sm:$0xff]
        %v460 = vld [vmem:[#allocation5 + $0x580] sm:$0xff]
        %v461 = vld [vmem:[#allocation5 + $0x588] sm:$0xff]
        %v462 = vld [vmem:[#allocation5 + $0x590] sm:$0xff]
        %v463 = vld [vmem:[#allocation5 + $0x598] sm:$0xff]
        %v464 = vld [vmem:[#allocation5 + $0x5a0] sm:$0xff]
        %v465 = vld [vmem:[#allocation5 + $0x5a8] sm:$0xff]
        %v466 = vld [vmem:[#allocation5 + $0x5b0] sm:$0xff]
        %v467 = vld [vmem:[#allocation5 + $0x5b8] sm:$0xff]
        %v468 = vld [vmem:[#allocation5 + $0x5c0] sm:$0xff]
        %v469 = vld [vmem:[#allocation5 + $0x5c8] sm:$0xff]
        %v470 = vld [vmem:[#allocation5 + $0x5d0] sm:$0xff]
        %v471 = vld [vmem:[#allocation5 + $0x5d8] sm:$0xff]
        %v472 = vld [vmem:[#allocation5 + $0x5e0] sm:$0xff]
        %v473 = vld [vmem:[#allocation5 + $0x5e8] sm:$0xff]
        %v474 = vld [vmem:[#allocation5 + $0x5f0] sm:$0xff]
        %v475 = vld [vmem:[#allocation5 + $0x5f8] sm:$0xff]
        %v476 = vld [vmem:[#allocation5 + $0x600] sm:$0xff]
        %v477 = vld [vmem:[#allocation5 + $0x608] sm:$0xff]
        %v478 = vld [vmem:[#allocation5 + $0x610] sm:$0xff]
        %v479 = vld [vmem:[#allocation5 + $0x618] sm:$0xff]
        %v480 = vld [vmem:[%s2] sm:$0xf]
        %v482 = vlaneseq
        %v483 = vshrl.u32 %v482, 7
        %v484 = vsub.s32 0, %v483
        %v485 = vrot.slane %v480, %v484
        %v486 = vlaneseq
        %v487 = vshrl.u32 %v486, 7
        %v488 = vsub.s32 1, %v487
        %v489 = vrot.slane %v480, %v488
        %v490 = vlaneseq
        %v491 = vshrl.u32 %v490, 7
        %v492 = vsub.s32 2, %v491
        %v493 = vrot.slane %v480, %v492
        %v494 = vlaneseq
        %v495 = vshrl.u32 %v494, 7
        %v496 = vsub.s32 3, %v495
        %v497 = vrot.slane %v480, %v496
        %v510 = vunpack.c.l.b16 %v276
        %v511 = vunpack.c.h.b16 %v276
        %v512 = vunpack.c.l.b16 %v277
        %v513 = vunpack.c.h.b16 %v277
        %v514 = vunpack.c.l.b16 %v278
        %v515 = vunpack.c.h.b16 %v278
        %v516 = vunpack.c.l.b16 %v279
        %v517 = vunpack.c.l.b16 %v280
        %v518 = vunpack.c.h.b16 %v280
        %v519 = vunpack.c.l.b16 %v281
        %v520 = vunpack.c.h.b16 %v281
        %v521 = vunpack.c.l.b16 %v282
        %v522 = vunpack.c.h.b16 %v282
        %v523 = vunpack.c.l.b16 %v283
        %v524 = vpack.c.b16 %v517, %v510
        %v525 = vpack.c.b16 %v518, %v511
        %v526 = vpack.c.b16 %v519, %v512
        %v527 = vpack.c.b16 %v520, %v513
        %v528 = vpack.c.b16 %v521, %v514
        %v529 = vpack.c.b16 %v522, %v515
        %v530 = vpack.c.b16 %v523, %v516
        %v733 = vunpack.c.l.b16 %v284
        %v734 = vunpack.c.h.b16 %v284
        %v735 = vunpack.c.l.b16 %v285
        %v736 = vunpack.c.h.b16 %v285
        %v737 = vunpack.c.l.b16 %v286
        %v738 = vunpack.c.h.b16 %v286
        %v739 = vunpack.c.l.b16 %v287
        %v740 = vunpack.c.h.b16 %v287
        %v741 = vunpack.c.l.b16 %v288
        %v742 = vunpack.c.h.b16 %v288
        %v743 = vunpack.c.l.b16 %v289
        %v744 = vunpack.c.h.b16 %v289
        %v745 = vunpack.c.l.b16 %v290
        %v746 = vunpack.c.h.b16 %v290
        %v747 = vunpack.c.l.b16 %v291
        %v748 = vunpack.c.h.b16 %v291
        %v749 = vunpack.c.l.b16 %v292
        %v750 = vunpack.c.h.b16 %v292
        %v751 = vunpack.c.l.b16 %v293
        %v752 = vunpack.c.h.b16 %v293
        %v753 = vunpack.c.l.b16 %v294
        %v754 = vunpack.c.h.b16 %v294
        %v755 = vunpack.c.l.b16 %v295
        %v756 = vunpack.c.h.b16 %v295
        %v757 = vunpack.c.l.b16 %v296
        %v758 = vunpack.c.h.b16 %v296
        %v759 = vunpack.c.l.b16 %v297
        %v760 = vunpack.c.h.b16 %v297
        %v761 = vunpack.c.l.b16 %v298
        %v762 = vunpack.c.h.b16 %v298
        %v763 = vunpack.c.l.b16 %v299
        %v764 = vunpack.c.h.b16 %v299
        %v765 = vunpack.c.l.b16 %v300
        %v766 = vunpack.c.h.b16 %v300
        %v767 = vunpack.c.l.b16 %v301
        %v768 = vunpack.c.h.b16 %v301
        %v769 = vunpack.c.l.b16 %v302
        %v770 = vunpack.c.h.b16 %v302
        %v771 = vunpack.c.l.b16 %v303
        %v772 = vunpack.c.h.b16 %v303
        %v773 = vunpack.c.l.b16 %v304
        %v774 = vunpack.c.h.b16 %v304
        %v775 = vunpack.c.l.b16 %v305
        %v776 = vunpack.c.h.b16 %v305
        %v777 = vunpack.c.l.b16 %v306
        %v778 = vunpack.c.h.b16 %v306
        %v779 = vunpack.c.l.b16 %v307
        %v780 = vunpack.c.h.b16 %v307
        %v781 = vunpack.c.l.b16 %v308
        %v782 = vunpack.c.h.b16 %v308
        %v783 = vunpack.c.l.b16 %v309
        %v784 = vunpack.c.h.b16 %v309
        %v785 = vunpack.c.l.b16 %v310
        %v786 = vunpack.c.h.b16 %v310
        %v787 = vunpack.c.l.b16 %v311
        %v788 = vunpack.c.h.b16 %v311
        %v789 = vunpack.c.l.b16 %v312
        %v790 = vunpack.c.h.b16 %v312
        %v791 = vunpack.c.l.b16 %v313
        %v792 = vunpack.c.h.b16 %v313
        %v793 = vunpack.c.l.b16 %v314
        %v794 = vunpack.c.h.b16 %v314
        %v795 = vunpack.c.l.b16 %v315
        %v796 = vunpack.c.h.b16 %v315
        %v797 = vunpack.c.l.b16 %v316
        %v798 = vunpack.c.h.b16 %v316
        %v799 = vunpack.c.l.b16 %v317
        %v800 = vunpack.c.h.b16 %v317
        %v801 = vunpack.c.l.b16 %v318
        %v802 = vunpack.c.h.b16 %v318
        %v803 = vunpack.c.l.b16 %v319
        %v804 = vunpack.c.h.b16 %v319
        %v805 = vunpack.c.l.b16 %v320
        %v806 = vunpack.c.h.b16 %v320
        %v807 = vunpack.c.l.b16 %v321
        %v808 = vunpack.c.h.b16 %v321
        %v809 = vunpack.c.l.b16 %v322
        %v810 = vunpack.c.h.b16 %v322
        %v811 = vunpack.c.l.b16 %v323
        %v812 = vunpack.c.h.b16 %v323
        %v813 = vunpack.c.l.b16 %v324
        %v814 = vunpack.c.h.b16 %v324
        %v815 = vunpack.c.l.b16 %v325
        %v816 = vunpack.c.h.b16 %v325
        %v817 = vunpack.c.l.b16 %v326
        %v818 = vunpack.c.h.b16 %v326
        %v819 = vunpack.c.l.b16 %v327
        %v820 = vunpack.c.h.b16 %v327
        %v821 = vunpack.c.l.b16 %v328
        %v822 = vunpack.c.h.b16 %v328
        %v823 = vunpack.c.l.b16 %v329
        %v824 = vunpack.c.h.b16 %v329
        %v825 = vunpack.c.l.b16 %v330
        %v826 = vunpack.c.h.b16 %v330
        %v827 = vunpack.c.l.b16 %v331
        %v828 = vunpack.c.h.b16 %v331
        %v829 = vunpack.c.l.b16 %v332
        %v830 = vunpack.c.h.b16 %v332
        %v831 = vunpack.c.l.b16 %v333
        %v832 = vunpack.c.h.b16 %v333
        %v833 = vunpack.c.l.b16 %v334
        %v834 = vunpack.c.h.b16 %v334
        %v835 = vunpack.c.l.b16 %v335
        %v836 = vunpack.c.h.b16 %v335
        %v837 = vunpack.c.l.b16 %v336
        %v838 = vunpack.c.h.b16 %v336
        %v839 = vunpack.c.l.b16 %v337
        %v840 = vunpack.c.h.b16 %v337
        %v841 = vunpack.c.l.b16 %v338
        %v842 = vunpack.c.h.b16 %v338
        %v843 = vunpack.c.l.b16 %v339
        %v844 = vunpack.c.h.b16 %v339
        %v845 = vunpack.c.l.b16 %v340
        %v846 = vunpack.c.h.b16 %v340
        %v847 = vunpack.c.l.b16 %v341
        %v848 = vunpack.c.h.b16 %v341
        %v849 = vunpack.c.l.b16 %v342
        %v850 = vunpack.c.h.b16 %v342
        %v851 = vunpack.c.l.b16 %v343
        %v852 = vunpack.c.h.b16 %v343
        %v853 = vunpack.c.l.b16 %v344
        %v854 = vunpack.c.h.b16 %v344
        %v855 = vunpack.c.l.b16 %v345
        %v856 = vunpack.c.h.b16 %v345
        %v857 = vunpack.c.l.b16 %v346
        %v858 = vunpack.c.h.b16 %v346
        %v859 = vunpack.c.l.b16 %v347
        %v860 = vunpack.c.h.b16 %v347
        %v861 = vunpack.c.l.b16 %v348
        %v862 = vunpack.c.h.b16 %v348
        %v863 = vunpack.c.l.b16 %v349
        %v864 = vunpack.c.h.b16 %v349
        %v865 = vunpack.c.l.b16 %v350
        %v866 = vunpack.c.h.b16 %v350
        %v867 = vunpack.c.l.b16 %v351
        %v868 = vunpack.c.h.b16 %v351
        %v869 = vunpack.c.l.b16 %v352
        %v870 = vunpack.c.h.b16 %v352
        %v871 = vunpack.c.l.b16 %v353
        %v872 = vunpack.c.h.b16 %v353
        %v873 = vunpack.c.l.b16 %v354
        %v874 = vunpack.c.h.b16 %v354
        %v875 = vunpack.c.l.b16 %v355
        %v876 = vunpack.c.h.b16 %v355
        %v877 = vunpack.c.l.b16 %v356
        %v878 = vunpack.c.h.b16 %v356
        %v879 = vunpack.c.l.b16 %v357
        %v880 = vunpack.c.h.b16 %v357
        %v881 = vunpack.c.l.b16 %v358
        %v882 = vunpack.c.h.b16 %v358
        %v883 = vunpack.c.l.b16 %v359
        %v884 = vunpack.c.h.b16 %v359
        %v885 = vunpack.c.l.b16 %v360
        %v886 = vunpack.c.h.b16 %v360
        %v887 = vunpack.c.l.b16 %v361
        %v888 = vunpack.c.h.b16 %v361
        %v889 = vunpack.c.l.b16 %v362
        %v890 = vunpack.c.h.b16 %v362
        %v891 = vunpack.c.l.b16 %v363
        %v892 = vunpack.c.h.b16 %v363
        %v893 = vunpack.c.l.b16 %v364
        %v894 = vunpack.c.h.b16 %v364
        %v895 = vunpack.c.l.b16 %v365
        %v896 = vunpack.c.h.b16 %v365
        %v897 = vunpack.c.l.b16 %v366
        %v898 = vunpack.c.h.b16 %v366
        %v899 = vunpack.c.l.b16 %v367
        %v900 = vunpack.c.h.b16 %v367
        %v901 = vunpack.c.l.b16 %v368
        %v902 = vunpack.c.h.b16 %v368
        %v903 = vunpack.c.l.b16 %v369
        %v904 = vunpack.c.h.b16 %v369
        %v905 = vunpack.c.l.b16 %v370
        %v906 = vunpack.c.h.b16 %v370
        %v907 = vunpack.c.l.b16 %v371
        %v908 = vunpack.c.h.b16 %v371
        %v909 = vunpack.c.l.b16 %v372
        %v910 = vunpack.c.h.b16 %v372
        %v911 = vunpack.c.l.b16 %v373
        %v912 = vunpack.c.h.b16 %v373
        %v913 = vunpack.c.l.b16 %v374
        %v914 = vunpack.c.h.b16 %v374
        %v915 = vunpack.c.l.b16 %v375
        %v916 = vunpack.c.h.b16 %v375
        %v917 = vunpack.c.l.b16 %v376
        %v918 = vunpack.c.h.b16 %v376
        %v919 = vunpack.c.l.b16 %v377
        %v920 = vunpack.c.h.b16 %v377
        %v921 = vunpack.c.l.b16 %v378
        %v922 = vunpack.c.h.b16 %v378
        %v923 = vunpack.c.l.b16 %v379
        %v924 = vunpack.c.h.b16 %v379
        %v925 = vunpack.c.l.b16 %v380
        %v926 = vunpack.c.h.b16 %v380
        %v927 = vunpack.c.l.b16 %v381
        %v928 = vunpack.c.h.b16 %v381
        %v929 = vunpack.c.l.b16 %v382
        %v930 = vunpack.c.h.b16 %v382
        %v931 = vunpack.c.l.b16 %v383
        %v932 = vunpack.c.h.b16 %v383
        %v933 = vunpack.c.l.b16 %v384
        %v934 = vunpack.c.h.b16 %v384
        %v935 = vunpack.c.l.b16 %v385
        %v936 = vunpack.c.h.b16 %v385
        %v937 = vunpack.c.l.b16 %v386
        %v938 = vunpack.c.h.b16 %v386
        %v939 = vunpack.c.l.b16 %v387
        %v940 = vunpack.c.h.b16 %v387
        %v941 = vunpack.c.l.b16 %v388
        %v942 = vunpack.c.h.b16 %v388
        %v943 = vunpack.c.l.b16 %v389
        %v944 = vunpack.c.h.b16 %v389
        %v945 = vunpack.c.l.b16 %v390
        %v946 = vunpack.c.h.b16 %v390
        %v947 = vunpack.c.l.b16 %v391
        %v948 = vunpack.c.h.b16 %v391
        %v949 = vunpack.c.l.b16 %v392
        %v950 = vunpack.c.h.b16 %v392
        %v951 = vunpack.c.l.b16 %v393
        %v952 = vunpack.c.h.b16 %v393
        %v953 = vunpack.c.l.b16 %v394
        %v954 = vunpack.c.h.b16 %v394
        %v955 = vunpack.c.l.b16 %v395
        %v956 = vunpack.c.h.b16 %v395
        %v957 = vunpack.c.l.b16 %v396
        %v958 = vunpack.c.h.b16 %v396
        %v959 = vunpack.c.l.b16 %v397
        %v960 = vunpack.c.h.b16 %v397
        %v961 = vunpack.c.l.b16 %v398
        %v962 = vunpack.c.h.b16 %v398
        %v963 = vunpack.c.l.b16 %v399
        %v964 = vunpack.c.h.b16 %v399
        %v965 = vunpack.c.l.b16 %v400
        %v966 = vunpack.c.h.b16 %v400
        %v967 = vunpack.c.l.b16 %v401
        %v968 = vunpack.c.h.b16 %v401
        %v969 = vunpack.c.l.b16 %v402
        %v970 = vunpack.c.h.b16 %v402
        %v971 = vunpack.c.l.b16 %v403
        %v972 = vunpack.c.h.b16 %v403
        %v973 = vunpack.c.l.b16 %v404
        %v974 = vunpack.c.h.b16 %v404
        %v975 = vunpack.c.l.b16 %v405
        %v976 = vunpack.c.h.b16 %v405
        %v977 = vunpack.c.l.b16 %v406
        %v978 = vunpack.c.h.b16 %v406
        %v979 = vunpack.c.l.b16 %v407
        %v980 = vunpack.c.h.b16 %v407
        %v981 = vunpack.c.l.b16 %v408
        %v982 = vunpack.c.h.b16 %v408
        %v983 = vunpack.c.l.b16 %v409
        %v984 = vunpack.c.h.b16 %v409
        %v985 = vunpack.c.l.b16 %v410
        %v986 = vunpack.c.h.b16 %v410
        %v987 = vunpack.c.l.b16 %v411
        %v988 = vunpack.c.h.b16 %v411
        %v989 = vunpack.c.l.b16 %v412
        %v990 = vunpack.c.h.b16 %v412
        %v991 = vunpack.c.l.b16 %v413
        %v992 = vunpack.c.h.b16 %v413
        %v993 = vunpack.c.l.b16 %v414
        %v994 = vunpack.c.h.b16 %v414
        %v995 = vunpack.c.l.b16 %v415
        %v996 = vunpack.c.h.b16 %v415
        %v997 = vunpack.c.l.b16 %v416
        %v998 = vunpack.c.h.b16 %v416
        %v999 = vunpack.c.l.b16 %v417
        %v1000 = vunpack.c.h.b16 %v417
        %v1001 = vunpack.c.l.b16 %v418
        %v1002 = vunpack.c.h.b16 %v418
        %v1003 = vunpack.c.l.b16 %v419
        %v1004 = vunpack.c.h.b16 %v419
        %v1005 = vunpack.c.l.b16 %v420
        %v1006 = vunpack.c.h.b16 %v420
        %v1007 = vunpack.c.l.b16 %v421
        %v1008 = vunpack.c.h.b16 %v421
        %v1009 = vunpack.c.l.b16 %v422
        %v1010 = vunpack.c.h.b16 %v422
        %v1011 = vunpack.c.l.b16 %v423
        %v1012 = vunpack.c.h.b16 %v423
        %v1013 = vunpack.c.l.b16 %v424
        %v1014 = vunpack.c.h.b16 %v424
        %v1015 = vunpack.c.l.b16 %v425
        %v1016 = vunpack.c.h.b16 %v425
        %v1017 = vunpack.c.l.b16 %v426
        %v1018 = vunpack.c.h.b16 %v426
        %v1019 = vunpack.c.l.b16 %v427
        %v1020 = vunpack.c.h.b16 %v427
        %v1021 = vunpack.c.l.b16 %v428
        %v1022 = vunpack.c.h.b16 %v428
        %v1023 = vunpack.c.l.b16 %v429
        %v1024 = vunpack.c.h.b16 %v429
        %v1025 = vunpack.c.l.b16 %v430
        %v1026 = vunpack.c.h.b16 %v430
        %v1027 = vunpack.c.l.b16 %v431
        %v1028 = vunpack.c.h.b16 %v431
        %v1029 = vunpack.c.l.b16 %v432
        %v1030 = vunpack.c.h.b16 %v432
        %v1031 = vunpack.c.l.b16 %v433
        %v1032 = vunpack.c.h.b16 %v433
        %v1033 = vunpack.c.l.b16 %v434
        %v1034 = vunpack.c.h.b16 %v434
        %v1035 = vunpack.c.l.b16 %v435
        %v1036 = vunpack.c.h.b16 %v435
        %v1037 = vunpack.c.l.b16 %v436
        %v1038 = vunpack.c.h.b16 %v436
        %v1039 = vunpack.c.l.b16 %v437
        %v1040 = vunpack.c.h.b16 %v437
        %v1041 = vunpack.c.l.b16 %v438
        %v1042 = vunpack.c.h.b16 %v438
        %v1043 = vunpack.c.l.b16 %v439
        %v1044 = vunpack.c.h.b16 %v439
        %v1045 = vunpack.c.l.b16 %v440
        %v1046 = vunpack.c.h.b16 %v440
        %v1047 = vunpack.c.l.b16 %v441
        %v1048 = vunpack.c.h.b16 %v441
        %v1049 = vunpack.c.l.b16 %v442
        %v1050 = vunpack.c.h.b16 %v442
        %v1051 = vunpack.c.l.b16 %v443
        %v1052 = vunpack.c.h.b16 %v443
        %v1053 = vunpack.c.l.b16 %v444
        %v1054 = vunpack.c.h.b16 %v444
        %v1055 = vunpack.c.l.b16 %v445
        %v1056 = vunpack.c.h.b16 %v445
        %v1057 = vunpack.c.l.b16 %v446
        %v1058 = vunpack.c.h.b16 %v446
        %v1059 = vunpack.c.l.b16 %v447
        %v1060 = vunpack.c.h.b16 %v447
        %v1061 = vunpack.c.l.b16 %v448
        %v1062 = vunpack.c.h.b16 %v448
        %v1063 = vunpack.c.l.b16 %v449
        %v1064 = vunpack.c.h.b16 %v449
        %v1065 = vunpack.c.l.b16 %v450
        %v1066 = vunpack.c.h.b16 %v450
        %v1067 = vunpack.c.l.b16 %v451
        %v1068 = vunpack.c.h.b16 %v451
        %v1069 = vunpack.c.l.b16 %v452
        %v1070 = vunpack.c.h.b16 %v452
        %v1071 = vunpack.c.l.b16 %v453
        %v1072 = vunpack.c.h.b16 %v453
        %v1073 = vunpack.c.l.b16 %v454
        %v1074 = vunpack.c.h.b16 %v454
        %v1075 = vunpack.c.l.b16 %v455
        %v1076 = vunpack.c.h.b16 %v455
        %v1077 = vunpack.c.l.b16 %v456
        %v1078 = vunpack.c.h.b16 %v456
        %v1079 = vunpack.c.l.b16 %v457
        %v1080 = vunpack.c.h.b16 %v457
        %v1081 = vunpack.c.l.b16 %v458
        %v1082 = vunpack.c.h.b16 %v458
        %v1083 = vunpack.c.l.b16 %v459
        %v1084 = vunpack.c.h.b16 %v459
        %v1085 = vunpack.c.l.b16 %v460
        %v1086 = vunpack.c.h.b16 %v460
        %v1087 = vunpack.c.l.b16 %v461
        %v1088 = vunpack.c.h.b16 %v461
        %v1089 = vunpack.c.l.b16 %v462
        %v1090 = vunpack.c.h.b16 %v462
        %v1091 = vunpack.c.l.b16 %v463
        %v1092 = vunpack.c.h.b16 %v463
        %v1093 = vunpack.c.l.b16 %v464
        %v1094 = vunpack.c.h.b16 %v464
        %v1095 = vunpack.c.l.b16 %v465
        %v1096 = vunpack.c.h.b16 %v465
        %v1097 = vunpack.c.l.b16 %v466
        %v1098 = vunpack.c.h.b16 %v466
        %v1099 = vunpack.c.l.b16 %v467
        %v1100 = vunpack.c.h.b16 %v467
        %v1101 = vunpack.c.l.b16 %v468
        %v1102 = vunpack.c.h.b16 %v468
        %v1103 = vunpack.c.l.b16 %v469
        %v1104 = vunpack.c.h.b16 %v469
        %v1105 = vunpack.c.l.b16 %v470
        %v1106 = vunpack.c.h.b16 %v470
        %v1107 = vunpack.c.l.b16 %v471
        %v1108 = vunpack.c.h.b16 %v471
        %v1109 = vunpack.c.l.b16 %v472
        %v1110 = vunpack.c.h.b16 %v472
        %v1111 = vunpack.c.l.b16 %v473
        %v1112 = vunpack.c.h.b16 %v473
        %v1113 = vunpack.c.l.b16 %v474
        %v1114 = vunpack.c.h.b16 %v474
        %v1115 = vunpack.c.l.b16 %v475
        %v1116 = vunpack.c.h.b16 %v475
        %v1117 = vunpack.c.l.b16 %v476
        %v1118 = vunpack.c.h.b16 %v476
        %v1119 = vunpack.c.l.b16 %v477
        %v1120 = vunpack.c.h.b16 %v477
        %v1121 = vunpack.c.l.b16 %v478
        %v1122 = vunpack.c.h.b16 %v478
        %v1123 = vunpack.c.l.b16 %v479
        %v1124 = vunpack.c.h.b16 %v479
        %v1125 = vpack.c.b16 %v737, %v733
        %v1126 = vpack.c.b16 %v738, %v734
        %v1127 = vpack.c.b16 %v739, %v735
        %v1128 = vpack.c.b16 %v740, %v736
        %v1129 = vpack.c.b16 %v745, %v741
        %v1130 = vpack.c.b16 %v746, %v742
        %v1131 = vpack.c.b16 %v747, %v743
        %v1132 = vpack.c.b16 %v748, %v744
        %v1133 = vpack.c.b16 %v753, %v749
        %v1134 = vpack.c.b16 %v754, %v750
        %v1135 = vpack.c.b16 %v755, %v751
        %v1136 = vpack.c.b16 %v756, %v752
        %v1137 = vpack.c.b16 %v761, %v757
        %v1138 = vpack.c.b16 %v762, %v758
        %v1139 = vpack.c.b16 %v763, %v759
        %v1140 = vpack.c.b16 %v764, %v760
        %v1141 = vpack.c.b16 %v769, %v765
        %v1142 = vpack.c.b16 %v770, %v766
        %v1143 = vpack.c.b16 %v771, %v767
        %v1144 = vpack.c.b16 %v772, %v768
        %v1145 = vpack.c.b16 %v777, %v773
        %v1146 = vpack.c.b16 %v778, %v774
        %v1147 = vpack.c.b16 %v779, %v775
        %v1148 = vpack.c.b16 %v780, %v776
        %v1149 = vpack.c.b16 %v785, %v781
        %v1150 = vpack.c.b16 %v786, %v782
        %v1151 = vpack.c.b16 %v787, %v783
        %v1152 = vpack.c.b16 %v788, %v784
        %v1153 = vpack.c.b16 %v793, %v789
        %v1154 = vpack.c.b16 %v794, %v790
        %v1155 = vpack.c.b16 %v795, %v791
        %v1156 = vpack.c.b16 %v796, %v792
        %v1157 = vpack.c.b16 %v801, %v797
        %v1158 = vpack.c.b16 %v802, %v798
        %v1159 = vpack.c.b16 %v803, %v799
        %v1160 = vpack.c.b16 %v804, %v800
        %v1161 = vpack.c.b16 %v809, %v805
        %v1162 = vpack.c.b16 %v810, %v806
        %v1163 = vpack.c.b16 %v811, %v807
        %v1164 = vpack.c.b16 %v812, %v808
        %v1165 = vpack.c.b16 %v817, %v813
        %v1166 = vpack.c.b16 %v818, %v814
        %v1167 = vpack.c.b16 %v819, %v815
        %v1168 = vpack.c.b16 %v820, %v816
        %v1169 = vpack.c.b16 %v825, %v821
        %v1170 = vpack.c.b16 %v826, %v822
        %v1171 = vpack.c.b16 %v827, %v823
        %v1172 = vpack.c.b16 %v828, %v824
        %v1173 = vpack.c.b16 %v833, %v829
        %v1174 = vpack.c.b16 %v834, %v830
        %v1175 = vpack.c.b16 %v835, %v831
        %v1176 = vpack.c.b16 %v836, %v832
        %v1177 = vpack.c.b16 %v841, %v837
        %v1178 = vpack.c.b16 %v842, %v838
        %v1179 = vpack.c.b16 %v843, %v839
        %v1180 = vpack.c.b16 %v844, %v840
        %v1181 = vpack.c.b16 %v849, %v845
        %v1182 = vpack.c.b16 %v850, %v846
        %v1183 = vpack.c.b16 %v851, %v847
        %v1184 = vpack.c.b16 %v852, %v848
        %v1185 = vpack.c.b16 %v857, %v853
        %v1186 = vpack.c.b16 %v858, %v854
        %v1187 = vpack.c.b16 %v859, %v855
        %v1188 = vpack.c.b16 %v860, %v856
        %v1189 = vpack.c.b16 %v865, %v861
        %v1190 = vpack.c.b16 %v866, %v862
        %v1191 = vpack.c.b16 %v867, %v863
        %v1192 = vpack.c.b16 %v868, %v864
        %v1193 = vpack.c.b16 %v873, %v869
        %v1194 = vpack.c.b16 %v874, %v870
        %v1195 = vpack.c.b16 %v875, %v871
        %v1196 = vpack.c.b16 %v876, %v872
        %v1197 = vpack.c.b16 %v881, %v877
        %v1198 = vpack.c.b16 %v882, %v878
        %v1199 = vpack.c.b16 %v883, %v879
        %v1200 = vpack.c.b16 %v884, %v880
        %v1201 = vpack.c.b16 %v889, %v885
        %v1202 = vpack.c.b16 %v890, %v886
        %v1203 = vpack.c.b16 %v891, %v887
        %v1204 = vpack.c.b16 %v892, %v888
        %v1205 = vpack.c.b16 %v897, %v893
        %v1206 = vpack.c.b16 %v898, %v894
        %v1207 = vpack.c.b16 %v899, %v895
        %v1208 = vpack.c.b16 %v900, %v896
        %v1209 = vpack.c.b16 %v905, %v901
        %v1210 = vpack.c.b16 %v906, %v902
        %v1211 = vpack.c.b16 %v907, %v903
        %v1212 = vpack.c.b16 %v908, %v904
        %v1213 = vpack.c.b16 %v913, %v909
        %v1214 = vpack.c.b16 %v914, %v910
        %v1215 = vpack.c.b16 %v915, %v911
        %v1216 = vpack.c.b16 %v916, %v912
        %v1217 = vpack.c.b16 %v921, %v917
        %v1218 = vpack.c.b16 %v922, %v918
        %v1219 = vpack.c.b16 %v923, %v919
        %v1220 = vpack.c.b16 %v924, %v920
        %v1221 = vpack.c.b16 %v929, %v925
        %v1222 = vpack.c.b16 %v930, %v926
        %v1223 = vpack.c.b16 %v931, %v927
        %v1224 = vpack.c.b16 %v932, %v928
        %v1225 = vpack.c.b16 %v937, %v933
        %v1226 = vpack.c.b16 %v938, %v934
        %v1227 = vpack.c.b16 %v939, %v935
        %v1228 = vpack.c.b16 %v940, %v936
        %v1229 = vpack.c.b16 %v945, %v941
        %v1230 = vpack.c.b16 %v946, %v942
        %v1231 = vpack.c.b16 %v947, %v943
        %v1232 = vpack.c.b16 %v948, %v944
        %v1233 = vpack.c.b16 %v953, %v949
        %v1234 = vpack.c.b16 %v954, %v950
        %v1235 = vpack.c.b16 %v955, %v951
        %v1236 = vpack.c.b16 %v956, %v952
        %v1237 = vpack.c.b16 %v961, %v957
        %v1238 = vpack.c.b16 %v962, %v958
        %v1239 = vpack.c.b16 %v963, %v959
        %v1240 = vpack.c.b16 %v964, %v960
        %v1241 = vpack.c.b16 %v969, %v965
        %v1242 = vpack.c.b16 %v970, %v966
        %v1243 = vpack.c.b16 %v971, %v967
        %v1244 = vpack.c.b16 %v972, %v968
        %v1245 = vpack.c.b16 %v977, %v973
        %v1246 = vpack.c.b16 %v978, %v974
        %v1247 = vpack.c.b16 %v979, %v975
        %v1248 = vpack.c.b16 %v980, %v976
        %v1249 = vpack.c.b16 %v985, %v981
        %v1250 = vpack.c.b16 %v986, %v982
        %v1251 = vpack.c.b16 %v987, %v983
        %v1252 = vpack.c.b16 %v988, %v984
        %v1253 = vpack.c.b16 %v993, %v989
        %v1254 = vpack.c.b16 %v994, %v990
        %v1255 = vpack.c.b16 %v995, %v991
        %v1256 = vpack.c.b16 %v996, %v992
        %v1257 = vpack.c.b16 %v1001, %v997
        %v1258 = vpack.c.b16 %v1002, %v998
        %v1259 = vpack.c.b16 %v1003, %v999
        %v1260 = vpack.c.b16 %v1004, %v1000
        %v1261 = vpack.c.b16 %v1009, %v1005
        %v1262 = vpack.c.b16 %v1010, %v1006
        %v1263 = vpack.c.b16 %v1011, %v1007
        %v1264 = vpack.c.b16 %v1012, %v1008
        %v1265 = vpack.c.b16 %v1017, %v1013
        %v1266 = vpack.c.b16 %v1018, %v1014
        %v1267 = vpack.c.b16 %v1019, %v1015
        %v1268 = vpack.c.b16 %v1020, %v1016
        %v1269 = vpack.c.b16 %v1025, %v1021
        %v1270 = vpack.c.b16 %v1026, %v1022
        %v1271 = vpack.c.b16 %v1027, %v1023
        %v1272 = vpack.c.b16 %v1028, %v1024
        %v1273 = vpack.c.b16 %v1033, %v1029
        %v1274 = vpack.c.b16 %v1034, %v1030
        %v1275 = vpack.c.b16 %v1035, %v1031
        %v1276 = vpack.c.b16 %v1036, %v1032
        %v1277 = vpack.c.b16 %v1041, %v1037
        %v1278 = vpack.c.b16 %v1042, %v1038
        %v1279 = vpack.c.b16 %v1043, %v1039
        %v1280 = vpack.c.b16 %v1044, %v1040
        %v1281 = vpack.c.b16 %v1049, %v1045
        %v1282 = vpack.c.b16 %v1050, %v1046
        %v1283 = vpack.c.b16 %v1051, %v1047
        %v1284 = vpack.c.b16 %v1052, %v1048
        %v1285 = vpack.c.b16 %v1057, %v1053
        %v1286 = vpack.c.b16 %v1058, %v1054
        %v1287 = vpack.c.b16 %v1059, %v1055
        %v1288 = vpack.c.b16 %v1060, %v1056
        %v1289 = vpack.c.b16 %v1065, %v1061
        %v1290 = vpack.c.b16 %v1066, %v1062
        %v1291 = vpack.c.b16 %v1067, %v1063
        %v1292 = vpack.c.b16 %v1068, %v1064
        %v1293 = vpack.c.b16 %v1073, %v1069
        %v1294 = vpack.c.b16 %v1074, %v1070
        %v1295 = vpack.c.b16 %v1075, %v1071
        %v1296 = vpack.c.b16 %v1076, %v1072
        %v1297 = vpack.c.b16 %v1081, %v1077
        %v1298 = vpack.c.b16 %v1082, %v1078
        %v1299 = vpack.c.b16 %v1083, %v1079
        %v1300 = vpack.c.b16 %v1084, %v1080
        %v1301 = vpack.c.b16 %v1089, %v1085
        %v1302 = vpack.c.b16 %v1090, %v1086
        %v1303 = vpack.c.b16 %v1091, %v1087
        %v1304 = vpack.c.b16 %v1092, %v1088
        %v1305 = vpack.c.b16 %v1097, %v1093
        %v1306 = vpack.c.b16 %v1098, %v1094
        %v1307 = vpack.c.b16 %v1099, %v1095
        %v1308 = vpack.c.b16 %v1100, %v1096
        %v1309 = vpack.c.b16 %v1105, %v1101
        %v1310 = vpack.c.b16 %v1106, %v1102
        %v1311 = vpack.c.b16 %v1107, %v1103
        %v1312 = vpack.c.b16 %v1108, %v1104
        %v1313 = vpack.c.b16 %v1113, %v1109
        %v1314 = vpack.c.b16 %v1114, %v1110
        %v1315 = vpack.c.b16 %v1115, %v1111
        %v1316 = vpack.c.b16 %v1116, %v1112
        %v1317 = vpack.c.b16 %v1121, %v1117
        %v1318 = vpack.c.b16 %v1122, %v1118
        %v1319 = vpack.c.b16 %v1123, %v1119
        %v1320 = vpack.c.b16 %v1124, %v1120
        %vm1517 = vcmask 130048
        %v1519 = vsel %vm1517, %v530, 0
        %1521 = vmatprep.subr.bf16.mxu0 %v1126
        %1522 = vmatpush1.bf16.msra.mxu0 %v1125
        %1523 = vmatprep.subr.bf16.mxu0 %v1130
        %1524 = vmatpush1.bf16.msra.mxu0 %v1129
        %1525 = vmatprep.subr.bf16.mxu0 %v1134
        %1526 = vmatpush1.bf16.msra.mxu0 %v1133
        %1527 = vmatprep.subr.bf16.mxu0 %v1138
        %1528 = vmatpush1.bf16.msra.mxu0 %v1137
        %1529 = vmatprep.subr.bf16.mxu0 %v1142
        %1530 = vmatpush1.bf16.msra.mxu0 %v1141
        %1531 = vmatprep.subr.bf16.mxu0 %v1146
        %1532 = vmatpush1.bf16.msra.mxu0 %v1145
        %1533 = vmatprep.subr.bf16.mxu0 %v1150
        %1534 = vmatpush1.bf16.msra.mxu0 %v1149
        %1535 = vmatprep.subr.bf16.mxu0 %v1154
        %1536 = vmatpush1.bf16.msra.mxu0 %v1153
        %1537 = vmatprep.subr.bf16.mxu0 %v1158
        %1538 = vmatpush1.bf16.msra.mxu0 %v1157
        %1539 = vmatprep.subr.bf16.mxu0 %v1162
        %1540 = vmatpush1.bf16.msra.mxu0 %v1161
        %1541 = vmatprep.subr.bf16.mxu0 %v1166
        %1542 = vmatpush1.bf16.msra.mxu0 %v1165
        %1543 = vmatprep.subr.bf16.mxu0 %v1170
        %1544 = vmatpush1.bf16.msra.mxu0 %v1169
        %1545 = vmatprep.subr.bf16.mxu0 %v1174
        %1546 = vmatpush1.bf16.msra.mxu0 %v1173
        %1547 = vmatprep.subr.bf16.mxu0 %v1178
        %1548 = vmatpush1.bf16.msra.mxu0 %v1177
        %1549 = vmatprep.subr.bf16.mxu0 %v1182
        %1550 = vmatpush1.bf16.msra.mxu0 %v1181
        %1551 = vmatprep.subr.bf16.mxu0 %v1186
        %1552 = vmatpush1.bf16.msra.mxu0 %v1185
        %1553 = vmatprep.mubr.bf16.mxu0 %v525
        %1554 = vmatmul.mubr.bf16.gmra.mrb[0].mxu0 %v524
        %v1555 = vpop.f32.mrb[0].mxu0
        %v1556 = vadd.f32 %v485, %v1555
        %v1557 = vpop.f32.mrb[0].mxu0
        %v1558 = vadd.f32 %v489, %v1557
        %v1559 = vpop.f32.mrb[0].mxu0
        %v1560 = vadd.f32 %v485, %v1559
        %v1561 = vpop.f32.mrb[0].mxu0
        %v1562 = vadd.f32 %v489, %v1561
        %1563 = vdwg.mxu0
        %1564 = vmatprep.subr.bf16.mxu0 %v1190
        %1565 = vmatpush1.bf16.msra.mxu0 %v1189
        %1566 = vmatprep.subr.bf16.mxu0 %v1194
        %1567 = vmatpush1.bf16.msra.mxu0 %v1193
        %1568 = vmatprep.subr.bf16.mxu0 %v1198
        %1569 = vmatpush1.bf16.msra.mxu0 %v1197
        %1570 = vmatprep.subr.bf16.mxu0 %v1202
        %1571 = vmatpush1.bf16.msra.mxu0 %v1201
        %1572 = vmatprep.subr.bf16.mxu0 %v1206
        %1573 = vmatpush1.bf16.msra.mxu0 %v1205
        %1574 = vmatprep.subr.bf16.mxu0 %v1210
        %1575 = vmatpush1.bf16.msra.mxu0 %v1209
        %1576 = vmatprep.subr.bf16.mxu0 %v1214
        %1577 = vmatpush1.bf16.msra.mxu0 %v1213
        %1578 = vmatprep.subr.bf16.mxu0 %v1218
        %1579 = vmatpush1.bf16.msra.mxu0 %v1217
        %1580 = vmatprep.subr.bf16.mxu0 %v1222
        %1581 = vmatpush1.bf16.msra.mxu0 %v1221
        %1582 = vmatprep.subr.bf16.mxu0 %v1226
        %1583 = vmatpush1.bf16.msra.mxu0 %v1225
        %1584 = vmatprep.subr.bf16.mxu0 %v1230
        %1585 = vmatpush1.bf16.msra.mxu0 %v1229
        %1586 = vmatprep.subr.bf16.mxu0 %v1234
        %1587 = vmatpush1.bf16.msra.mxu0 %v1233
        %1588 = vmatprep.subr.bf16.mxu0 %v1238
        %1589 = vmatpush1.bf16.msra.mxu0 %v1237
        %1590 = vmatprep.subr.bf16.mxu0 %v1242
        %1591 = vmatpush1.bf16.msra.mxu0 %v1241
        %1592 = vmatprep.subr.bf16.mxu0 %v1246
        %1593 = vmatpush1.bf16.msra.mxu0 %v1245
        %1594 = vmatprep.subr.bf16.mxu0 %v1250
        %1595 = vmatpush1.bf16.msra.mxu0 %v1249
        %1596 = vmatprep.mubr.bf16.mxu0 %v527
        %1597 = vmatmul.mubr.bf16.gmra.mrb[0].mxu0 %v526
        %v1598 = vpop.f32.mrb[0].mxu0
        %v1599 = vadd.f32 %v1556, %v1598
        %v1600 = vpop.f32.mrb[0].mxu0
        %v1601 = vadd.f32 %v1558, %v1600
        %v1602 = vpop.f32.mrb[0].mxu0
        %v1603 = vadd.f32 %v1560, %v1602
        %v1604 = vpop.f32.mrb[0].mxu0
        %v1605 = vadd.f32 %v1562, %v1604
        %1606 = vdwg.mxu0
        %1607 = vmatprep.subr.bf16.mxu0 %v1254
        %1608 = vmatpush1.bf16.msra.mxu0 %v1253
        %1609 = vmatprep.subr.bf16.mxu0 %v1258
        %1610 = vmatpush1.bf16.msra.mxu0 %v1257
        %1611 = vmatprep.subr.bf16.mxu0 %v1262
        %1612 = vmatpush1.bf16.msra.mxu0 %v1261
        %1613 = vmatprep.subr.bf16.mxu0 %v1266
        %1614 = vmatpush1.bf16.msra.mxu0 %v1265
        %1615 = vmatprep.subr.bf16.mxu0 %v1270
        %1616 = vmatpush1.bf16.msra.mxu0 %v1269
        %1617 = vmatprep.subr.bf16.mxu0 %v1274
        %1618 = vmatpush1.bf16.msra.mxu0 %v1273
        %1619 = vmatprep.subr.bf16.mxu0 %v1278
        %1620 = vmatpush1.bf16.msra.mxu0 %v1277
        %1621 = vmatprep.subr.bf16.mxu0 %v1282
        %1622 = vmatpush1.bf16.msra.mxu0 %v1281
        %1623 = vmatprep.subr.bf16.mxu0 %v1286
        %1624 = vmatpush1.bf16.msra.mxu0 %v1285
        %1625 = vmatprep.subr.bf16.mxu0 %v1290
        %1626 = vmatpush1.bf16.msra.mxu0 %v1289
        %1627 = vmatprep.subr.bf16.mxu0 %v1294
        %1628 = vmatpush1.bf16.msra.mxu0 %v1293
        %1629 = vmatprep.subr.bf16.mxu0 %v1298
        %1630 = vmatpush1.bf16.msra.mxu0 %v1297
        %1631 = vmatprep.subr.bf16.mxu0 %v1302
        %1632 = vmatpush1.bf16.msra.mxu0 %v1301
        %1633 = vmatprep.subr.bf16.mxu0 %v1306
        %1634 = vmatpush1.bf16.msra.mxu0 %v1305
        %1635 = vmatprep.subr.bf16.mxu0 %v1310
        %1636 = vmatpush1.bf16.msra.mxu0 %v1309
        %1637 = vmatprep.subr.bf16.mxu0 %v1314
        %1638 = vmatpush1.bf16.msra.mxu0 %v1313
        %1639 = vmatprep.mubr.bf16.mxu0 %v529
        %1640 = vmatmul.mubr.bf16.gmra.mrb[0].mxu0 %v528
        %v1641 = vpop.f32.mrb[0].mxu0
        %v1642 = vadd.f32 %v1599, %v1641
        %v1643 = vpop.f32.mrb[0].mxu0
        %v1644 = vadd.f32 %v1601, %v1643
        %v1645 = vpop.f32.mrb[0].mxu0
        %v1646 = vadd.f32 %v1603, %v1645
        %v1647 = vpop.f32.mrb[0].mxu0
        %v1648 = vadd.f32 %v1605, %v1647
        %1649 = vdwg.mxu0
        %1650 = vmatprep.subr.bf16.mxu0 %v1318
        %1651 = vmatpush1.bf16.msra.mxu0 %v1317
        %1652 = vmatprep.subr.bf16.mxu0 0
        %1653 = vmatpush1.bf16.msra.mxu0 0
        %1654 = vmatprep.subr.bf16.mxu0 0
        %1655 = vmatpush1.bf16.msra.mxu0 0
        %1656 = vmatprep.subr.bf16.mxu0 0
        %1657 = vmatpush1.bf16.msra.mxu0 0
        %1658 = vmatprep.subr.bf16.mxu0 0
        %1659 = vmatpush1.bf16.msra.mxu0 0
        %1660 = vmatprep.subr.bf16.mxu0 0
        %1661 = vmatpush1.bf16.msra.mxu0 0
        %1662 = vmatprep.subr.bf16.mxu0 0
        %1663 = vmatpush1.bf16.msra.mxu0 0
        %1664 = vmatprep.subr.bf16.mxu0 0
        %1665 = vmatpush1.bf16.msra.mxu0 0
        %1666 = vmatprep.subr.bf16.mxu0 0
        %1667 = vmatpush1.bf16.msra.mxu0 0
        %1668 = vmatprep.subr.bf16.mxu0 0
        %1669 = vmatpush1.bf16.msra.mxu0 0
        %1670 = vmatprep.subr.bf16.mxu0 0
        %1671 = vmatpush1.bf16.msra.mxu0 0
        %1672 = vmatprep.subr.bf16.mxu0 0
        %1673 = vmatpush1.bf16.msra.mxu0 0
        %1674 = vmatprep.subr.bf16.mxu0 0
        %1675 = vmatpush1.bf16.msra.mxu0 0
        %1676 = vmatprep.subr.bf16.mxu0 0
        %1677 = vmatpush1.bf16.msra.mxu0 0
        %1678 = vmatprep.subr.bf16.mxu0 0
        %1679 = vmatpush1.bf16.msra.mxu0 0
        %1680 = vmatprep.subr.bf16.mxu0 0
        %1681 = vmatpush1.bf16.msra.mxu0 0
        %1682 = vmatprep.mubr.bf16.mxu0 0
        %1683 = vmatmul.mubr.bf16.gmra.mrb[0].mxu0 %v1519
        %v1684 = vpop.f32.mrb[0].mxu0
        %v1685 = vadd.f32 %v1642, %v1684
        %v1686 = vpop.f32.mrb[0].mxu0
        %v1687 = vadd.f32 %v1644, %v1686
        %v1688 = vpop.f32.mrb[0].mxu0
        %v1689 = vadd.f32 %v1646, %v1688
        %v1690 = vpop.f32.mrb[0].mxu0
        %v1691 = vadd.f32 %v1648, %v1690
        %1692 = vdwg.mxu0
        %1693 = vmatprep.subr.bf16.mxu0 %v1128
        %1694 = vmatpush1.bf16.msra.mxu0 %v1127
        %1695 = vmatprep.subr.bf16.mxu0 %v1132
        %1696 = vmatpush1.bf16.msra.mxu0 %v1131
        %1697 = vmatprep.subr.bf16.mxu0 %v1136
        %1698 = vmatpush1.bf16.msra.mxu0 %v1135
        %1699 = vmatprep.subr.bf16.mxu0 %v1140
        %1700 = vmatpush1.bf16.msra.mxu0 %v1139
        %1701 = vmatprep.subr.bf16.mxu0 %v1144
        %1702 = vmatpush1.bf16.msra.mxu0 %v1143
        %1703 = vmatprep.subr.bf16.mxu0 %v1148
        %1704 = vmatpush1.bf16.msra.mxu0 %v1147
        %1705 = vmatprep.subr.bf16.mxu0 %v1152
        %1706 = vmatpush1.bf16.msra.mxu0 %v1151
        %1707 = vmatprep.subr.bf16.mxu0 %v1156
        %1708 = vmatpush1.bf16.msra.mxu0 %v1155
        %1709 = vmatprep.subr.bf16.mxu0 %v1160
        %1710 = vmatpush1.bf16.msra.mxu0 %v1159
        %1711 = vmatprep.subr.bf16.mxu0 %v1164
        %1712 = vmatpush1.bf16.msra.mxu0 %v1163
        %1713 = vmatprep.subr.bf16.mxu0 %v1168
        %1714 = vmatpush1.bf16.msra.mxu0 %v1167
        %1715 = vmatprep.subr.bf16.mxu0 %v1172
        %1716 = vmatpush1.bf16.msra.mxu0 %v1171
        %1717 = vmatprep.subr.bf16.mxu0 %v1176
        %1718 = vmatpush1.bf16.msra.mxu0 %v1175
        %1719 = vmatprep.subr.bf16.mxu0 %v1180
        %1720 = vmatpush1.bf16.msra.mxu0 %v1179
        %1721 = vmatprep.subr.bf16.mxu0 %v1184
        %1722 = vmatpush1.bf16.msra.mxu0 %v1183
        %1723 = vmatprep.subr.bf16.mxu0 %v1188
        %1724 = vmatpush1.bf16.msra.mxu0 %v1187
        %1725 = vmatprep.mubr.bf16.mxu0 %v525
        %1726 = vmatmul.mubr.bf16.gmra.mrb[0].mxu0 %v524
        %v1727 = vpop.f32.mrb[0].mxu0
        %v1728 = vadd.f32 %v493, %v1727
        %v1729 = vpop.f32.mrb[0].mxu0
        %v1730 = vadd.f32 %v497, %v1729
        %v1731 = vpop.f32.mrb[0].mxu0
        %v1732 = vadd.f32 %v493, %v1731
        %v1733 = vpop.f32.mrb[0].mxu0
        %v1734 = vadd.f32 %v497, %v1733
        %1735 = vdwg.mxu0
        %1736 = vmatprep.subr.bf16.mxu0 %v1192
        %1737 = vmatpush1.bf16.msra.mxu0 %v1191
        %1738 = vmatprep.subr.bf16.mxu0 %v1196
        %1739 = vmatpush1.bf16.msra.mxu0 %v1195
        %1740 = vmatprep.subr.bf16.mxu0 %v1200
        %1741 = vmatpush1.bf16.msra.mxu0 %v1199
        %1742 = vmatprep.subr.bf16.mxu0 %v1204
        %1743 = vmatpush1.bf16.msra.mxu0 %v1203
        %1744 = vmatprep.subr.bf16.mxu0 %v1208
        %1745 = vmatpush1.bf16.msra.mxu0 %v1207
        %1746 = vmatprep.subr.bf16.mxu0 %v1212
        %1747 = vmatpush1.bf16.msra.mxu0 %v1211
        %1748 = vmatprep.subr.bf16.mxu0 %v1216
        %1749 = vmatpush1.bf16.msra.mxu0 %v1215
        %1750 = vmatprep.subr.bf16.mxu0 %v1220
        %1751 = vmatpush1.bf16.msra.mxu0 %v1219
        %1752 = vmatprep.subr.bf16.mxu0 %v1224
        %1753 = vmatpush1.bf16.msra.mxu0 %v1223
        %1754 = vmatprep.subr.bf16.mxu0 %v1228
        %1755 = vmatpush1.bf16.msra.mxu0 %v1227
        %1756 = vmatprep.subr.bf16.mxu0 %v1232
        %1757 = vmatpush1.bf16.msra.mxu0 %v1231
        %1758 = vmatprep.subr.bf16.mxu0 %v1236
        %1759 = vmatpush1.bf16.msra.mxu0 %v1235
        %1760 = vmatprep.subr.bf16.mxu0 %v1240
        %1761 = vmatpush1.bf16.msra.mxu0 %v1239
        %1762 = vmatprep.subr.bf16.mxu0 %v1244
        %1763 = vmatpush1.bf16.msra.mxu0 %v1243
        %1764 = vmatprep.subr.bf16.mxu0 %v1248
        %1765 = vmatpush1.bf16.msra.mxu0 %v1247
        %1766 = vmatprep.subr.bf16.mxu0 %v1252
        %1767 = vmatpush1.bf16.msra.mxu0 %v1251
        %1768 = vmatprep.mubr.bf16.mxu0 %v527
        %1769 = vmatmul.mubr.bf16.gmra.mrb[0].mxu0 %v526
        %v1770 = vpop.f32.mrb[0].mxu0
        %v1771 = vadd.f32 %v1728, %v1770
        %v1772 = vpop.f32.mrb[0].mxu0
        %v1773 = vadd.f32 %v1730, %v1772
        %v1774 = vpop.f32.mrb[0].mxu0
        %v1775 = vadd.f32 %v1732, %v1774
        %v1776 = vpop.f32.mrb[0].mxu0
        %v1777 = vadd.f32 %v1734, %v1776
        %1778 = vdwg.mxu0
        %1779 = vmatprep.subr.bf16.mxu0 %v1256
        %1780 = vmatpush1.bf16.msra.mxu0 %v1255
        %1781 = vmatprep.subr.bf16.mxu0 %v1260
        %1782 = vmatpush1.bf16.msra.mxu0 %v1259
        %1783 = vmatprep.subr.bf16.mxu0 %v1264
        %1784 = vmatpush1.bf16.msra.mxu0 %v1263
        %1785 = vmatprep.subr.bf16.mxu0 %v1268
        %1786 = vmatpush1.bf16.msra.mxu0 %v1267
        %1787 = vmatprep.subr.bf16.mxu0 %v1272
        %1788 = vmatpush1.bf16.msra.mxu0 %v1271
        %1789 = vmatprep.subr.bf16.mxu0 %v1276
        %1790 = vmatpush1.bf16.msra.mxu0 %v1275
        %1791 = vmatprep.subr.bf16.mxu0 %v1280
        %1792 = vmatpush1.bf16.msra.mxu0 %v1279
        %1793 = vmatprep.subr.bf16.mxu0 %v1284
        %1794 = vmatpush1.bf16.msra.mxu0 %v1283
        %1795 = vmatprep.subr.bf16.mxu0 %v1288
        %1796 = vmatpush1.bf16.msra.mxu0 %v1287
        %1797 = vmatprep.subr.bf16.mxu0 %v1292
        %1798 = vmatpush1.bf16.msra.mxu0 %v1291
        %1799 = vmatprep.subr.bf16.mxu0 %v1296
        %1800 = vmatpush1.bf16.msra.mxu0 %v1295
        %1801 = vmatprep.subr.bf16.mxu0 %v1300
        %1802 = vmatpush1.bf16.msra.mxu0 %v1299
        %1803 = vmatprep.subr.bf16.mxu0 %v1304
        %1804 = vmatpush1.bf16.msra.mxu0 %v1303
        %1805 = vmatprep.subr.bf16.mxu0 %v1308
        %1806 = vmatpush1.bf16.msra.mxu0 %v1307
        %1807 = vmatprep.subr.bf16.mxu0 %v1312
        %1808 = vmatpush1.bf16.msra.mxu0 %v1311
        %1809 = vmatprep.subr.bf16.mxu0 %v1316
        %1810 = vmatpush1.bf16.msra.mxu0 %v1315
        %1811 = vmatprep.mubr.bf16.mxu0 %v529
        %1812 = vmatmul.mubr.bf16.gmra.mrb[0].mxu0 %v528
        %v1813 = vpop.f32.mrb[0].mxu0
        %v1814 = vadd.f32 %v1771, %v1813
        %v1815 = vpop.f32.mrb[0].mxu0
        %v1816 = vadd.f32 %v1773, %v1815
        %v1817 = vpop.f32.mrb[0].mxu0
        %v1818 = vadd.f32 %v1775, %v1817
        %v1819 = vpop.f32.mrb[0].mxu0
        %v1820 = vadd.f32 %v1777, %v1819
        %1821 = vdwg.mxu0
        %1822 = vmatprep.subr.bf16.mxu0 %v1320
        %1823 = vmatpush1.bf16.msra.mxu0 %v1319
        %1824 = vmatprep.subr.bf16.mxu0 0
        %1825 = vmatpush1.bf16.msra.mxu0 0
        %1826 = vmatprep.subr.bf16.mxu0 0
        %1827 = vmatpush1.bf16.msra.mxu0 0
        %1828 = vmatprep.subr.bf16.mxu0 0
        %1829 = vmatpush1.bf16.msra.mxu0 0
        %1830 = vmatprep.subr.bf16.mxu0 0
        %1831 = vmatpush1.bf16.msra.mxu0 0
        %1832 = vmatprep.subr.bf16.mxu0 0
        %1833 = vmatpush1.bf16.msra.mxu0 0
        %1834 = vmatprep.subr.bf16.mxu0 0
        %1835 = vmatpush1.bf16.msra.mxu0 0
        %1836 = vmatprep.subr.bf16.mxu0 0
        %1837 = vmatpush1.bf16.msra.mxu0 0
        %1838 = vmatprep.subr.bf16.mxu0 0
        %1839 = vmatpush1.bf16.msra.mxu0 0
        %1840 = vmatprep.subr.bf16.mxu0 0
        %1841 = vmatpush1.bf16.msra.mxu0 0
        %1842 = vmatprep.subr.bf16.mxu0 0
        %1843 = vmatpush1.bf16.msra.mxu0 0
        %1844 = vmatprep.subr.bf16.mxu0 0
        %1845 = vmatpush1.bf16.msra.mxu0 0
        %1846 = vmatprep.subr.bf16.mxu0 0
        %1847 = vmatpush1.bf16.msra.mxu0 0
        %1848 = vmatprep.subr.bf16.mxu0 0
        %1849 = vmatpush1.bf16.msra.mxu0 0
        %1850 = vmatprep.subr.bf16.mxu0 0
        %1851 = vmatpush1.bf16.msra.mxu0 0
        %1852 = vmatprep.subr.bf16.mxu0 0
        %1853 = vmatpush1.bf16.msra.mxu0 0
        %1854 = vmatprep.mubr.bf16.mxu0 0
        %1855 = vmatmul.mubr.bf16.gmra.mrb[0].mxu0 %v1519
        %v1856 = vpop.f32.mrb[0].mxu0
        %v1857 = vadd.f32 %v1814, %v1856
        %v1858 = vpop.f32.mrb[0].mxu0
        %v1859 = vadd.f32 %v1816, %v1858
        %v1860 = vpop.f32.mrb[0].mxu0
        %v1861 = vadd.f32 %v1818, %v1860
        %v1862 = vpop.f32.mrb[0].mxu0
        %v1863 = vadd.f32 %v1820, %v1862
        %1864 = vdwg.mxu0
        %v1865 = vmax.f32 %v1685, 0.0
        %v1866 = vmax.f32 %v1687, 0.0
        %v1867 = vmax.f32 %v1857, 0.0
        %v1868 = vmax.f32 %v1859, 0.0
        %v1869 = vmax.f32 %v1689, 0.0
        %v1870 = vmax.f32 %v1691, 0.0
        %v1871 = vmax.f32 %v1861, 0.0
        %v1872 = vmax.f32 %v1863, 0.0
        %v1873 = vpack.c.bf16 %v1869, %v1865
        %v1874 = vpack.c.bf16 %v1870, %v1866
        %v1875 = vpack.c.bf16 %v1871, %v1867
        %v1876 = vpack.c.bf16 %v1872, %v1868
        %v1877 = vld [vmem:[#allocation7] sm:$0xf]
        %v1878 = vld [vmem:[#allocation7 + $0x4] sm:$0xf]
        %v1879 = vld [vmem:[#allocation7 + $0x8] sm:$0xf]
        %v1880 = vld [vmem:[#allocation7 + $0xc] sm:$0xf]
        %v1881 = vld [vmem:[#allocation7 + $0x10] sm:$0xf]
        %v1882 = vld [vmem:[#allocation7 + $0x14] sm:$0xf]
        %v1883 = vld [vmem:[#allocation7 + $0x18] sm:$0xf]
        %v1884 = vld [vmem:[#allocation7 + $0x1c] sm:$0xf]
        %v1885 = vld [vmem:[#allocation7 + $0x20] sm:$0xf]
        %v1886 = vld [vmem:[#allocation7 + $0x24] sm:$0xf]
        %v1887 = vld [vmem:[#allocation7 + $0x28] sm:$0xf]
        %v1888 = vld [vmem:[#allocation7 + $0x2c] sm:$0xf]
        %v1889 = vld [vmem:[#allocation7 + $0x30] sm:$0xf]
        %v1890 = vld [vmem:[#allocation7 + $0x34] sm:$0xf]
        %v1891 = vld [vmem:[#allocation7 + $0x38] sm:$0xf]
        %v1892 = vld [vmem:[#allocation7 + $0x3c] sm:$0xf]
        %v1893 = vld [vmem:[#allocation7 + $0x40] sm:$0xf]
        %v1894 = vld [vmem:[#allocation7 + $0x44] sm:$0xf]
        %v1895 = vld [vmem:[#allocation7 + $0x48] sm:$0xf]
        %v1896 = vld [vmem:[#allocation7 + $0x4c] sm:$0xf]
        %v1897 = vld [vmem:[#allocation7 + $0x50] sm:$0xf]
        %v1898 = vld [vmem:[#allocation7 + $0x54] sm:$0xf]
        %v1899 = vld [vmem:[#allocation7 + $0x58] sm:$0xf]
        %v1900 = vld [vmem:[#allocation7 + $0x5c] sm:$0xf]
        %v1901 = vld [vmem:[#allocation7 + $0x60] sm:$0xf]
        %v1902 = vld [vmem:[#allocation7 + $0x64] sm:$0xf]
        %v1903 = vld [vmem:[#allocation7 + $0x68] sm:$0xf]
        %v1904 = vld [vmem:[#allocation7 + $0x6c] sm:$0xf]
        %v1905 = vld [vmem:[#allocation7 + $0x70] sm:$0xf]
        %v1906 = vld [vmem:[#allocation7 + $0x74] sm:$0xf]
        %v1907 = vld [vmem:[#allocation7 + $0x78] sm:$0xf]
        %v1908 = vld [vmem:[#allocation7 + $0x7c] sm:$0xf]
        %v1909 = vld [vmem:[#allocation7 + $0x80] sm:$0xf]
        %v1910 = vld [vmem:[#allocation7 + $0x84] sm:$0xf]
        %v1911 = vld [vmem:[#allocation7 + $0x88] sm:$0xf]
        %v1912 = vld [vmem:[#allocation7 + $0x8c] sm:$0xf]
        %v1913 = vld [vmem:[#allocation7 + $0x90] sm:$0xf]
        %v1914 = vld [vmem:[#allocation7 + $0x94] sm:$0xf]
        %v1915 = vld [vmem:[#allocation7 + $0x98] sm:$0xf]
        %v1916 = vld [vmem:[#allocation7 + $0x9c] sm:$0xf]
        %v1917 = vld [vmem:[#allocation7 + $0xa0] sm:$0xf]
        %v1918 = vld [vmem:[#allocation7 + $0xa4] sm:$0xf]
        %v1919 = vld [vmem:[#allocation7 + $0xa8] sm:$0xf]
        %v1920 = vld [vmem:[#allocation7 + $0xac] sm:$0xf]
        %v1921 = vld [vmem:[#allocation7 + $0xb0] sm:$0xf]
        %v1922 = vld [vmem:[#allocation7 + $0xb4] sm:$0xf]
        %v1923 = vld [vmem:[#allocation7 + $0xb8] sm:$0xf]
        %v1924 = vld [vmem:[#allocation7 + $0xbc] sm:$0xf]
        %v1925 = vld [vmem:[#allocation7 + $0xc0] sm:$0xf]
        %v1926 = vld [vmem:[#allocation7 + $0xc4] sm:$0xf]
        %v1927 = vld [vmem:[#allocation7 + $0xc8] sm:$0xf]
        %v1928 = vld [vmem:[#allocation7 + $0xcc] sm:$0xf]
        %v1929 = vld [vmem:[#allocation7 + $0xd0] sm:$0xf]
        %v1930 = vld [vmem:[#allocation7 + $0xd4] sm:$0xf]
        %v1931 = vld [vmem:[#allocation7 + $0xd8] sm:$0xf]
        %v1932 = vld [vmem:[#allocation7 + $0xdc] sm:$0xf]
        %v1933 = vld [vmem:[#allocation7 + $0xe0] sm:$0xf]
        %v1934 = vld [vmem:[#allocation7 + $0xe4] sm:$0xf]
        %v1935 = vld [vmem:[#allocation7 + $0xe8] sm:$0xf]
        %v1936 = vld [vmem:[#allocation7 + $0xec] sm:$0xf]
        %v1937 = vld [vmem:[#allocation7 + $0xf0] sm:$0xf]
        %v1938 = vld [vmem:[#allocation7 + $0xf4] sm:$0xf]
        %v1939 = vld [vmem:[#allocation7 + $0xf8] sm:$0xf]
        %v1940 = vld [vmem:[#allocation7 + $0xfc] sm:$0xf]
        %v1941 = vld [vmem:[%s4] sm:$0x1]
        %v1943 = vlaneseq
        %v1944 = vshrl.u32 %v1943, 7
        %v1945 = vsub.s32 0, %v1944
        %v1946 = vrot.slane %v1941, %v1945
        %v2012 = vunpack.c.l.b16 %v1877
        %v2013 = vunpack.c.l.b16 %v1878
        %v2014 = vunpack.c.l.b16 %v1879
        %v2015 = vunpack.c.l.b16 %v1880
        %v2016 = vunpack.c.l.b16 %v1881
        %v2017 = vunpack.c.l.b16 %v1882
        %v2018 = vunpack.c.l.b16 %v1883
        %v2019 = vunpack.c.l.b16 %v1884
        %v2020 = vunpack.c.l.b16 %v1885
        %v2021 = vunpack.c.l.b16 %v1886
        %v2022 = vunpack.c.l.b16 %v1887
        %v2023 = vunpack.c.l.b16 %v1888
        %v2024 = vunpack.c.l.b16 %v1889
        %v2025 = vunpack.c.l.b16 %v1890
        %v2026 = vunpack.c.l.b16 %v1891
        %v2027 = vunpack.c.l.b16 %v1892
        %v2028 = vunpack.c.l.b16 %v1893
        %v2029 = vunpack.c.l.b16 %v1894
        %v2030 = vunpack.c.l.b16 %v1895
        %v2031 = vunpack.c.l.b16 %v1896
        %v2032 = vunpack.c.l.b16 %v1897
        %v2033 = vunpack.c.l.b16 %v1898
        %v2034 = vunpack.c.l.b16 %v1899
        %v2035 = vunpack.c.l.b16 %v1900
        %v2036 = vunpack.c.l.b16 %v1901
        %v2037 = vunpack.c.l.b16 %v1902
        %v2038 = vunpack.c.l.b16 %v1903
        %v2039 = vunpack.c.l.b16 %v1904
        %v2040 = vunpack.c.l.b16 %v1905
        %v2041 = vunpack.c.l.b16 %v1906
        %v2042 = vunpack.c.l.b16 %v1907
        %v2043 = vunpack.c.l.b16 %v1908
        %v2044 = vunpack.c.l.b16 %v1909
        %v2045 = vunpack.c.l.b16 %v1910
        %v2046 = vunpack.c.l.b16 %v1911
        %v2047 = vunpack.c.l.b16 %v1912
        %v2048 = vunpack.c.l.b16 %v1913
        %v2049 = vunpack.c.l.b16 %v1914
        %v2050 = vunpack.c.l.b16 %v1915
        %v2051 = vunpack.c.l.b16 %v1916
        %v2052 = vunpack.c.l.b16 %v1917
        %v2053 = vunpack.c.l.b16 %v1918
        %v2054 = vunpack.c.l.b16 %v1919
        %v2055 = vunpack.c.l.b16 %v1920
        %v2056 = vunpack.c.l.b16 %v1921
        %v2057 = vunpack.c.l.b16 %v1922
        %v2058 = vunpack.c.l.b16 %v1923
        %v2059 = vunpack.c.l.b16 %v1924
        %v2060 = vunpack.c.l.b16 %v1925
        %v2061 = vunpack.c.l.b16 %v1926
        %v2062 = vunpack.c.l.b16 %v1927
        %v2063 = vunpack.c.l.b16 %v1928
        %v2064 = vunpack.c.l.b16 %v1929
        %v2065 = vunpack.c.l.b16 %v1930
        %v2066 = vunpack.c.l.b16 %v1931
        %v2067 = vunpack.c.l.b16 %v1932
        %v2068 = vunpack.c.l.b16 %v1933
        %v2069 = vunpack.c.l.b16 %v1934
        %v2070 = vunpack.c.l.b16 %v1935
        %v2071 = vunpack.c.l.b16 %v1936
        %v2072 = vunpack.c.l.b16 %v1937
        %v2073 = vunpack.c.l.b16 %v1938
        %v2074 = vunpack.c.l.b16 %v1939
        %v2075 = vunpack.c.l.b16 %v1940
        %v2076 = vpack.c.b16 %v2013, %v2012
        %v2077 = vpack.c.b16 %v2015, %v2014
        %v2078 = vpack.c.b16 %v2017, %v2016
        %v2079 = vpack.c.b16 %v2019, %v2018
        %v2080 = vpack.c.b16 %v2021, %v2020
        %v2081 = vpack.c.b16 %v2023, %v2022
        %v2082 = vpack.c.b16 %v2025, %v2024
        %v2083 = vpack.c.b16 %v2027, %v2026
        %v2084 = vpack.c.b16 %v2029, %v2028
        %v2085 = vpack.c.b16 %v2031, %v2030
        %v2086 = vpack.c.b16 %v2033, %v2032
        %v2087 = vpack.c.b16 %v2035, %v2034
        %v2088 = vpack.c.b16 %v2037, %v2036
        %v2089 = vpack.c.b16 %v2039, %v2038
        %v2090 = vpack.c.b16 %v2041, %v2040
        %v2091 = vpack.c.b16 %v2043, %v2042
        %v2092 = vpack.c.b16 %v2045, %v2044
        %v2093 = vpack.c.b16 %v2047, %v2046
        %v2094 = vpack.c.b16 %v2049, %v2048
        %v2095 = vpack.c.b16 %v2051, %v2050
        %v2096 = vpack.c.b16 %v2053, %v2052
        %v2097 = vpack.c.b16 %v2055, %v2054
        %v2098 = vpack.c.b16 %v2057, %v2056
        %v2099 = vpack.c.b16 %v2059, %v2058
        %v2100 = vpack.c.b16 %v2061, %v2060
        %v2101 = vpack.c.b16 %v2063, %v2062
        %v2102 = vpack.c.b16 %v2065, %v2064
        %v2103 = vpack.c.b16 %v2067, %v2066
        %v2104 = vpack.c.b16 %v2069, %v2068
        %v2105 = vpack.c.b16 %v2071, %v2070
        %v2106 = vpack.c.b16 %v2073, %v2072
        %v2107 = vpack.c.b16 %v2075, %v2074
        %2140 = vmatprep.subr.bf16.mxu0 0
        %2141 = vmatpush1.bf16.msra.mxu0 %v2076
        %2142 = vmatprep.subr.bf16.mxu0 0
        %2143 = vmatpush1.bf16.msra.mxu0 %v2077
        %2144 = vmatprep.subr.bf16.mxu0 0
        %2145 = vmatpush1.bf16.msra.mxu0 %v2078
        %2146 = vmatprep.subr.bf16.mxu0 0
        %2147 = vmatpush1.bf16.msra.mxu0 %v2079
        %2148 = vmatprep.subr.bf16.mxu0 0
        %2149 = vmatpush1.bf16.msra.mxu0 %v2080
        %2150 = vmatprep.subr.bf16.mxu0 0
        %2151 = vmatpush1.bf16.msra.mxu0 %v2081
        %2152 = vmatprep.subr.bf16.mxu0 0
        %2153 = vmatpush1.bf16.msra.mxu0 %v2082
        %2154 = vmatprep.subr.bf16.mxu0 0
        %2155 = vmatpush1.bf16.msra.mxu0 %v2083
        %2156 = vmatprep.subr.bf16.mxu0 0
        %2157 = vmatpush1.bf16.msra.mxu0 %v2084
        %2158 = vmatprep.subr.bf16.mxu0 0
        %2159 = vmatpush1.bf16.msra.mxu0 %v2085
        %2160 = vmatprep.subr.bf16.mxu0 0
        %2161 = vmatpush1.bf16.msra.mxu0 %v2086
        %2162 = vmatprep.subr.bf16.mxu0 0
        %2163 = vmatpush1.bf16.msra.mxu0 %v2087
        %2164 = vmatprep.subr.bf16.mxu0 0
        %2165 = vmatpush1.bf16.msra.mxu0 %v2088
        %2166 = vmatprep.subr.bf16.mxu0 0
        %2167 = vmatpush1.bf16.msra.mxu0 %v2089
        %2168 = vmatprep.subr.bf16.mxu0 0
        %2169 = vmatpush1.bf16.msra.mxu0 %v2090
        %2170 = vmatprep.subr.bf16.mxu0 0
        %2171 = vmatpush1.bf16.msra.mxu0 %v2091
        %2172 = vmatprep.mubr.bf16.mxu0 %v1874
        %2173 = vmatmul.mubr.bf16.gmra.mrb[0].mxu0 %v1873
        %v2174 = vpop.f32.mrb[0].mxu0
        %v2175 = vadd.f32 %v1946, %v2174
        %v2176 = vpop.f32.mrb[0].mxu0
        %v2177 = vpop.f32.mrb[0].mxu0
        %v2178 = vadd.f32 %v1946, %v2177
        %v2179 = vpop.f32.mrb[0].mxu0
        %2180 = vdwg.mxu0
        %2181 = vmatprep.subr.bf16.mxu0 0
        %2182 = vmatpush1.bf16.msra.mxu0 %v2092
        %2183 = vmatprep.subr.bf16.mxu0 0
        %2184 = vmatpush1.bf16.msra.mxu0 %v2093
        %2185 = vmatprep.subr.bf16.mxu0 0
        %2186 = vmatpush1.bf16.msra.mxu0 %v2094
        %2187 = vmatprep.subr.bf16.mxu0 0
        %2188 = vmatpush1.bf16.msra.mxu0 %v2095
        %2189 = vmatprep.subr.bf16.mxu0 0
        %2190 = vmatpush1.bf16.msra.mxu0 %v2096
        %2191 = vmatprep.subr.bf16.mxu0 0
        %2192 = vmatpush1.bf16.msra.mxu0 %v2097
        %2193 = vmatprep.subr.bf16.mxu0 0
        %2194 = vmatpush1.bf16.msra.mxu0 %v2098
        %2195 = vmatprep.subr.bf16.mxu0 0
        %2196 = vmatpush1.bf16.msra.mxu0 %v2099
        %2197 = vmatprep.subr.bf16.mxu0 0
        %2198 = vmatpush1.bf16.msra.mxu0 %v2100
        %2199 = vmatprep.subr.bf16.mxu0 0
        %2200 = vmatpush1.bf16.msra.mxu0 %v2101
        %2201 = vmatprep.subr.bf16.mxu0 0
        %2202 = vmatpush1.bf16.msra.mxu0 %v2102
        %2203 = vmatprep.subr.bf16.mxu0 0
        %2204 = vmatpush1.bf16.msra.mxu0 %v2103
        %2205 = vmatprep.subr.bf16.mxu0 0
        %2206 = vmatpush1.bf16.msra.mxu0 %v2104
        %2207 = vmatprep.subr.bf16.mxu0 0
        %2208 = vmatpush1.bf16.msra.mxu0 %v2105
        %2209 = vmatprep.subr.bf16.mxu0 0
        %2210 = vmatpush1.bf16.msra.mxu0 %v2106
        %2211 = vmatprep.subr.bf16.mxu0 0
        %2212 = vmatpush1.bf16.msra.mxu0 %v2107
        %2213 = vmatprep.mubr.bf16.mxu0 %v1876
        %2214 = vmatmul.mubr.bf16.gmra.mrb[0].mxu0 %v1875
        %v2215 = vpop.f32.mrb[0].mxu0
        %v2216 = vadd.f32 %v2175, %v2215
        %v2217 = vpop.f32.mrb[0].mxu0
        %v2218 = vpop.f32.mrb[0].mxu0
        %v2219 = vadd.f32 %v2178, %v2218
        %v2220 = vpop.f32.mrb[0].mxu0
        %2221 = vdwg.mxu0
        %2222 = vst [vmem:[%s272] sm:$0xff] %v2216
        %2223 = vst [vmem:[%s272 + $0x8] sm:$0xff] %v2219
        %s2224 = sand.u32 %s141, 1
        %s2225 = scalar_lea.sflag [#allocation4], %s2224
        %s2226 = sand.u32 %s141, 1
        %s2227 = smul.addr %s2226, 16
        %s2228 = scalar_lea.vmem [#allocation8], %s2227
        // Predicated region
        $region53: #{tpu_custom_call.1} parent=39 // pred_check
          %p2229 = pneg %p151
        $region54: #{tpu_custom_call.1} parent=39 // pred_check_branch
          %2231 = sbr.rel (%p2229) target = $region56
        $region55: #{tpu_custom_call.1} parent=39 // pred_region
          %s2232 = smul.u32 2, %s23
          %s2234 = ssub.s32 256, 256
          %2235 = vsyncadd %s2225, %s2234
          %s2236 = smul.addr %s2232, 128
          %s2237 = scalar_lea.hbm %s5, %s2236
          %s2238 = sshll.u32 %s2228, 4
          %s2239 = int_to_ptr.vmem [resolvable:$true] %s2238
          %2244 = dma.vmem_to_hbm [thread:$0]  %s2239, 256, %s2237, %s2225, 128, 128, 8
        $region56: #{tpu_custom_call.1} parent=39 // pred_fallthru
          _
      $region40: #{tpu_custom_call.1} parent=5 // pred_fallthru
        _
      %p2245 = scmp.le.s32.totalorder 2, %s18
      // Predicated region
      $region57: #{tpu_custom_call.1} parent=5 // pred_check
        %p2246 = pneg %p2245
      $region58: #{tpu_custom_call.1} parent=5 // pred_check_branch
        %2248 = sbr.rel (%p2246) target = $region60
      $region59: #{tpu_custom_call.1} parent=5 // pred_region
        %s2249 = ssub.s32 %s18, 2
        // Predicated region
        $region61: #{tpu_custom_call.1} parent=59 // pred_check
          %p2250 = pneg %p157
        $region62: #{tpu_custom_call.1} parent=59 // pred_check_branch
          %2252 = sbr.rel (%p2250) target = $region64
        $region63: #{tpu_custom_call.1} parent=59 // pred_region
          %s2253 = sand.u32 %s142, 1
          %s2254 = scalar_lea.sflag [#allocation4], %s2253
          %s2255 = sand.u32 %s142, 1
          %s2256 = smul.addr %s2255, 16
          %s2257 = scalar_lea.vmem [#allocation8], %s2256
          %2258 = dma.done %s2254, 256
        $region64: #{tpu_custom_call.1} parent=59 // pred_fallthru
          _
      $region60: #{tpu_custom_call.1} parent=5 // pred_fallthru
        _
    $region6: #{tpu_custom_call.1} parent=1 // loop_footer
      %s22 = sadd.s32 1, %s18
    $region7: #{tpu_custom_call.1} parent=1 // loop_footer_branch
      %17 = sbr.rel target = $region3
    $region8: #{tpu_custom_call.1} parent=1 // loop_exit
      _
    %2259 = vsyncpa [#allocation3], 1
    %s2260 = scalar_lea.sflag [#allocation3], 1
    %2261 = vsyncpa %s2260, 1
    %2262 = vsyncpa [#allocation6], 1
    %2263 = vsyncpa [#allocation4], 1
    %s2264 = scalar_lea.sflag [#allocation4], 1
    %2265 = vsyncpa %s2264, 1

</llo_original>
